<compile_context>
chip_gen: v7x
topology: tpu7x:2x2x1
jax: 0.10.0
libtpu: 0.0.40
codegen_flags: <defaults>
</compile_context>

<pallas_src>
import functools

import numpy as np
import jax
import jax.numpy as jnp
from jax import lax
from jax.experimental import pallas as pl
from jax.experimental.pallas import tpu as pltpu


# ----------------------------------------------------------------------------
# Folded conv matrix: concat([max_c, mean_c], lanes) @ M == conv2d output.
# The (H, W, K)-dependent scatter plan is pure host-side numpy and cached; the
# actual matrix build uses jnp ops so it can live inside jax.jit.
# ----------------------------------------------------------------------------
@functools.lru_cache(maxsize=None)
def _conv_fold_plan(H, W, K):
    pad = K // 2
    HW = H * W
    ho, wo = np.meshgrid(np.arange(H), np.arange(W), indexing="ij")
    dst = (ho * W + wo).reshape(-1)
    rows, cols, taps = [], [], []
    for c in range(2):                      # 0 -> channel-max, 1 -> channel-mean
        for kh in range(K):
            for kw in range(K):
                hs = (ho + kh - pad).reshape(-1)
                ws = (wo + kw - pad).reshape(-1)
                valid = (hs >= 0) & (hs < H) & (ws >= 0) & (ws < W)
                src = (hs * W + ws)[valid]
                rows.append(c * HW + src)
                cols.append(dst[valid])
                taps.append(np.full(src.shape, c * K * K + kh * K + kw))
    return (np.concatenate(rows).astype(np.int32),
            np.concatenate(cols).astype(np.int32),
            np.concatenate(taps).astype(np.int32))


def _build_conv_matrix(conv_w, H, W, dtype=jnp.bfloat16):
    """Fold the KxK conv (2 in-ch -> 1 out, zero-pad K//2, no bias) into a
    (2*HW, HW) matrix (traceable; runs once under jit)."""
    K = int(conv_w.shape[-1])
    HW = H * W
    rows, cols, taps = _conv_fold_plan(H, W, K)
    vals = conv_w.reshape(-1).astype(jnp.float32)[taps]
    cm = jnp.zeros((2 * HW, HW), jnp.float32).at[rows, cols].add(vals)
    return cm.astype(dtype)


def _pick_bt(B, max_bt=8):
    """Images per grid step: keep >=2 grid steps (v7x has 2 TensorCores) and
    pick a divisor of B so no padding/masking is needed."""
    if B <= 1:
        return 1
    bt = min(max_bt, max(1, B // 2))
    while B % bt:
        bt -= 1
    return bt


# ----------------------------------------------------------------------------
# Kernel: one block = Bt images, full C x HW.
# ----------------------------------------------------------------------------
def cbam_kernel(x_ref, w1_ref, b1_ref, w2_ref, b2_ref, cm_ref, o_ref,
                *, hw_inv, c_inv):
    x = x_ref[...]                                          # (Bt, C, HW) f32
    bt = x.shape[0]

    # ---- channel attention: spatial max/avg pool + shared MLP (all images
    #      and both pooling branches fused into one pair of matmuls) ----
    maxp = jnp.max(x, axis=2)                               # (Bt, C)
    avgp = jnp.sum(x, axis=2) * hw_inv                      # (Bt, C)
    pooled = jnp.concatenate([maxp, avgp], axis=0)          # (2*Bt, C)
    h = jnp.dot(pooled, w1_ref[...],
                preferred_element_type=jnp.float32) + b1_ref[...]   # (2*Bt, hid)
    h = jnp.maximum(h, 0.0)
    m = jnp.dot(h, w2_ref[...],
                preferred_element_type=jnp.float32) + b2_ref[...]   # (2*Bt, C)
    ch_att = jax.nn.sigmoid(m[:bt] + m[bt:])                # (Bt, C) = mlp(max)+mlp(avg)
    scaled = x * ch_att[:, :, None]                         # (Bt, C, HW)

    # ---- spatial attention: channel max/mean + KxK conv as ONE MXU matmul
    #      over all Bt images (M = Bt rows per weight push) ----
    max_c = jnp.max(scaled, axis=1)                         # (Bt, HW)
    mean_c = jnp.sum(scaled, axis=1) * c_inv                # (Bt, HW)
    rows = jnp.concatenate([max_c, mean_c], axis=1)         # (Bt, 2*HW)
    conv = jnp.dot(rows.astype(jnp.bfloat16), cm_ref[...],
                   preferred_element_type=jnp.float32)      # (Bt, HW), f32 acc
    sp_att = jax.nn.sigmoid(conv)                           # (Bt, HW)

    o_ref[...] = (scaled * sp_att[:, None, :]).astype(o_ref.dtype)


# ----------------------------------------------------------------------------
# Wrapper (jitted: conv-matrix fold + param prep trace once per shape set).
# ----------------------------------------------------------------------------
@jax.jit
def cbam_pallas(x_nchw, w1, b1, w2, b2, conv_w):
    B, C, H, W = x_nchw.shape
    hid = w1.shape[1]
    HW = H * W
    K = int(conv_w.shape[-1])

    assert K % 2 == 1, "folded conv matrix assumes odd kernel size, stride 1, pad K//2"
    # TODO(synk): cm is O(HW^2); for large spatial sizes (>= ~32x32 on v7x's
    # 64 MiB VMEM) tile it along the output-HW axis or fall back to a
    # shift-based conv instead of this dense fold.
    assert 2 * HW * HW * 2 <= 8 * 1024 * 1024, "folded conv matrix too large for VMEM"

    bt = _pick_bt(B)

    x_k = x_nchw.reshape(B, C, HW).astype(jnp.float32)       # NCHW kept, lane-dense HW
    w1_k = w1.astype(jnp.float32)                             # (C, hid)
    b1_k = b1.reshape(1, hid).astype(jnp.float32)
    w2_k = w2.astype(jnp.float32)                             # (hid, C)
    b2_k = b2.reshape(1, C).astype(jnp.float32)
    cm = _build_conv_matrix(conv_w, H, W, dtype=jnp.bfloat16)  # (2*HW, HW) bf16

    kernel = functools.partial(cbam_kernel, hw_inv=1.0 / HW, c_inv=1.0 / C)

    out = pl.pallas_call(
        kernel,
        out_shape=jax.ShapeDtypeStruct((B, C, HW), jnp.float32),
        grid=(B // bt,),
        in_specs=[
            pl.BlockSpec((bt, C, HW), lambda b: (b, 0, 0)),   # x (Bt images / block)
            pl.BlockSpec((C, hid), lambda b: (0, 0)),         # MLP W1
            pl.BlockSpec((1, hid), lambda b: (0, 0)),         # MLP b1
            pl.BlockSpec((hid, C), lambda b: (0, 0)),         # MLP W2
            pl.BlockSpec((1, C), lambda b: (0, 0)),           # MLP b2
            pl.BlockSpec((2 * HW, HW), lambda b: (0, 0)),     # folded conv matrix (bf16)
        ],
        out_specs=pl.BlockSpec((bt, C, HW), lambda b: (b, 0, 0)),
        compiler_params=pltpu.CompilerParams(dimension_semantics=("parallel",)),
    )(x_k, w1_k, b1_k, w2_k, b2_k, cm)

    return out.reshape(B, C, H, W)


# ----------------------------------------------------------------------------
# Pure-JAX reference matching the PyTorch module semantics (NCHW).
# ----------------------------------------------------------------------------
def cbam_ref(x, w1, b1, w2, b2, conv_w):
    K = conv_w.shape[-1]
    pad = K // 2
    maxp = jnp.max(x, axis=(2, 3))
    avgp = jnp.mean(x, axis=(2, 3))

    def mlp(v):
        return jnp.maximum(v @ w1 + b1, 0.0) @ w2 + b2

    ch = jax.nn.sigmoid(mlp(maxp) + mlp(avgp))
    scaled = ch[:, :, None, None] * x
    max_c = jnp.max(scaled, axis=1, keepdims=True)
    mean_c = jnp.mean(scaled, axis=1, keepdims=True)
    sp_in = jnp.concatenate([max_c, mean_c], axis=1)
    conv = lax.conv_general_dilated(sp_in, conv_w, window_strides=(1, 1),
                                    padding=[(pad, pad), (pad, pad)],
                                    dimension_numbers=('NCHW', 'OIHW', 'NCHW'))
    sp = jax.nn.sigmoid(conv)
    return sp * scaled


if __name__ == "__main__":
    B, C, H, W = 8, 32, 16, 16           # B=8 -> Bt=4, grid=(2,): both TCs busy
    reduction, K = 16, 7
    hid = C // reduction

    key = jax.random.PRNGKey(0)
    kx, k1, k2, k3, k4, k5 = jax.random.split(key, 6)
    x = jax.random.normal(kx, (B, C, H, W), jnp.float32)
    # deterministic synthetic parameters (shapes match nn.Linear / nn.Conv2d)
    w1 = jax.random.normal(k1, (C, hid), jnp.float32) * (1.0 / jnp.sqrt(C))
    b1 = jax.random.normal(k2, (hid,), jnp.float32) * 0.1
    w2 = jax.random.normal(k3, (hid, C), jnp.float32) * (1.0 / jnp.sqrt(hid))
    b2 = jax.random.normal(k4, (C,), jnp.float32) * 0.1
    conv_w = jax.random.normal(k5, (1, 2, K, K), jnp.float32) * (1.0 / jnp.sqrt(2.0 * K * K))

    out = jax.block_until_ready(cbam_pallas(x, w1, b1, w2, b2, conv_w))
    ref = jax.block_until_ready(cbam_ref(x, w1, b1, w2, b2, conv_w))

    assert out.shape == (B, C, H, W), out.shape
    err = float(jnp.max(jnp.abs(out - ref)))
    # bf16 conv matrix => loosened tolerance vs the all-f32 reference.
    assert jnp.allclose(out, ref, atol=3e-2, rtol=3e-2), f"max abs err {err}"
    print("KERNEL_OK")
</pallas_src>

<mosaic_0001>
module attributes {stable_mosaic.version = 11 : i64} {
  func.func private @main(%arg0: i32) attributes {dimension_semantics = [#tpu.dimension_semantics<core_parallel>], iteration_bounds = array<i64: 2>, tpu.core_type = #tpu.core_type<sc_scalar_subcore>, window_params = []} {
    return
  }
}

module attributes {stable_mosaic.version = 11 : i64} {
  func.func private @main(%arg0: i32) attributes {dimension_semantics = [#tpu.dimension_semantics<core_parallel>], iteration_bounds = array<i64: 2>, tpu.core_type = #tpu.core_type<sc_scalar_subcore>, window_params = []} {
    return
  }
}

module attributes {stable_mosaic.version = 11 : i64} {
  func.func @cbam_kernel(%arg0: i32, %arg1: memref<4x32x256xf32, #tpu.memory_space<vmem>>, %arg2: memref<32x2xf32, #tpu.memory_space<vmem>>, %arg3: memref<1x2xf32, #tpu.memory_space<vmem>>, %arg4: memref<2x32xf32, #tpu.memory_space<vmem>>, %arg5: memref<1x32xf32, #tpu.memory_space<vmem>>, %arg6: memref<512x256xbf16, #tpu.memory_space<vmem>>, %arg7: memref<4x32x256xf32, #tpu.memory_space<vmem>>) attributes {dimension_semantics = [#tpu.dimension_semantics<parallel>], iteration_bounds = array<i64: 2>, scalar_prefetch = 0 : i64, scratch_operands = 0 : i64, tpu.core_type = #tpu.core_type<tc>, window_params = [{transform_indices = @transform_0, window_bounds = array<i64: 4, 32, 256>}, {pipeline_mode = #tpu.pipeline_mode<synchronous>, transform_indices = @transform_1, window_bounds = array<i64: 32, 2>}, {pipeline_mode = #tpu.pipeline_mode<synchronous>, transform_indices = @transform_2, window_bounds = array<i64: 1, 2>}, {pipeline_mode = #tpu.pipeline_mode<synchronous>, transform_indices = @transform_3, window_bounds = array<i64: 2, 32>}, {pipeline_mode = #tpu.pipeline_mode<synchronous>, transform_indices = @transform_4, window_bounds = array<i64: 1, 32>}, {pipeline_mode = #tpu.pipeline_mode<synchronous>, transform_indices = @transform_5, window_bounds = array<i64: 512, 256>}, {transform_indices = @transform_6, window_bounds = array<i64: 4, 32, 256>}]} {
    %c0 = arith.constant 0 : index
    %c0_0 = arith.constant 0 : index
    %c0_1 = arith.constant 0 : index
    %0 = vector.load %arg1[%c0, %c0_0, %c0_1] : memref<4x32x256xf32, #tpu.memory_space<vmem>>, vector<4x32x256xf32>
    %cst = arith.constant dense<0xFF800000> : vector<4x32xf32>
    %1 = vector.multi_reduction <maximumf>, %0, %cst [2] : vector<4x32x256xf32> to vector<4x32xf32>
    %cst_2 = arith.constant dense<0.000000e+00> : vector<4x32xf32>
    %2 = vector.multi_reduction <add>, %0, %cst_2 [2] : vector<4x32x256xf32> to vector<4x32xf32>
    %cst_3 = arith.constant 3.906250e-03 : f32
    %3 = vector.broadcast %cst_3 : f32 to vector<4x32xf32>
    %4 = arith.mulf %2, %3 : vector<4x32xf32>
    %5 = tpu.concatenate %1, %4 in 0 : vector<4x32xf32>, vector<4x32xf32> -> vector<8x32xf32>
    %c0_4 = arith.constant 0 : index
    %c0_5 = arith.constant 0 : index
    %6 = vector.load %arg2[%c0_4, %c0_5] : memref<32x2xf32, #tpu.memory_space<vmem>>, vector<32x2xf32>
    %cst_6 = arith.constant dense<0.000000e+00> : vector<8x2xf32>
    %7 = tpu.matmul %5, %6, %cst_6 {dimension_numbers = #tpu.dot_dimension_numbers<[1], [0], [0], [1], [0, 0, 1, 1], [], []>} : vector<8x32xf32>, vector<32x2xf32>, vector<8x2xf32> -> vector<8x2xf32>
    %c0_7 = arith.constant 0 : index
    %c0_8 = arith.constant 0 : index
    %8 = vector.load %arg3[%c0_7, %c0_8] : memref<1x2xf32, #tpu.memory_space<vmem>>, vector<1x2xf32>
    %9 = vector.broadcast %8 : vector<1x2xf32> to vector<8x2xf32>
    %10 = arith.addf %7, %9 : vector<8x2xf32>
    %cst_9 = arith.constant 0.000000e+00 : f32
    %11 = vector.broadcast %cst_9 : f32 to vector<8x2xf32>
    %12 = arith.maximumf %10, %11 : vector<8x2xf32>
    %c0_10 = arith.constant 0 : index
    %c0_11 = arith.constant 0 : index
    %13 = vector.load %arg4[%c0_10, %c0_11] : memref<2x32xf32, #tpu.memory_space<vmem>>, vector<2x32xf32>
    %cst_12 = arith.constant dense<0.000000e+00> : vector<8x32xf32>
    %14 = tpu.matmul %12, %13, %cst_12 {dimension_numbers = #tpu.dot_dimension_numbers<[1], [0], [0], [1], [0, 0, 1, 1], [], []>} : vector<8x2xf32>, vector<2x32xf32>, vector<8x32xf32> -> vector<8x32xf32>
    %c0_13 = arith.constant 0 : index
    %c0_14 = arith.constant 0 : index
    %15 = vector.load %arg5[%c0_13, %c0_14] : memref<1x32xf32, #tpu.memory_space<vmem>>, vector<1x32xf32>
    %16 = vector.broadcast %15 : vector<1x32xf32> to vector<8x32xf32>
    %17 = arith.addf %14, %16 : vector<8x32xf32>
    %18 = vector.extract_strided_slice %17 {offsets = [0, 0], sizes = [4, 32], strides = [1, 1]} : vector<8x32xf32> to vector<4x32xf32>
    %19 = vector.extract_strided_slice %17 {offsets = [4, 0], sizes = [4, 32], strides = [1, 1]} : vector<8x32xf32> to vector<4x32xf32>
    %20 = arith.addf %18, %19 : vector<4x32xf32>
    %21 = arith.negf %20 : vector<4x32xf32>
    %22 = math.exp %21 : vector<4x32xf32>
    %cst_15 = arith.constant 1.000000e+00 : f32
    %23 = vector.broadcast %cst_15 : f32 to vector<4x32xf32>
    %24 = arith.addf %23, %22 : vector<4x32xf32>
    %25 = arith.divf %23, %24 : vector<4x32xf32>
    %26 = vector.shape_cast %25 : vector<4x32xf32> to vector<4x32x1xf32>
    %27 = vector.broadcast %26 : vector<4x32x1xf32> to vector<4x32x256xf32>
    %28 = arith.mulf %0, %27 : vector<4x32x256xf32>
    %cst_16 = arith.constant dense<0xFF800000> : vector<4x256xf32>
    %29 = vector.multi_reduction <maximumf>, %28, %cst_16 [1] : vector<4x32x256xf32> to vector<4x256xf32>
    %cst_17 = arith.constant dense<0.000000e+00> : vector<4x256xf32>
    %30 = vector.multi_reduction <add>, %28, %cst_17 [1] : vector<4x32x256xf32> to vector<4x256xf32>
    %cst_18 = arith.constant 3.125000e-02 : f32
    %31 = vector.broadcast %cst_18 : f32 to vector<4x256xf32>
    %32 = arith.mulf %30, %31 : vector<4x256xf32>
    %33 = tpu.concatenate %29, %32 in 1 : vector<4x256xf32>, vector<4x256xf32> -> vector<4x512xf32>
    %34 = arith.truncf %33 : vector<4x512xf32> to vector<4x512xbf16>
    %c0_19 = arith.constant 0 : index
    %c0_20 = arith.constant 0 : index
    %35 = vector.load %arg6[%c0_19, %c0_20] : memref<512x256xbf16, #tpu.memory_space<vmem>>, vector<512x256xbf16>
    %cst_21 = arith.constant dense<0.000000e+00> : vector<4x256xf32>
    %36 = tpu.matmul %34, %35, %cst_21 {dimension_numbers = #tpu.dot_dimension_numbers<[1], [0], [0], [1], [0, 0, 1, 1], [], []>} : vector<4x512xbf16>, vector<512x256xbf16>, vector<4x256xf32> -> vector<4x256xf32>
    %37 = arith.negf %36 : vector<4x256xf32>
    %38 = math.exp %37 : vector<4x256xf32>
    %cst_22 = arith.constant 1.000000e+00 : f32
    %39 = vector.broadcast %cst_22 : f32 to vector<4x256xf32>
    %40 = arith.addf %39, %38 : vector<4x256xf32>
    %41 = arith.divf %39, %40 : vector<4x256xf32>
    %42 = vector.shape_cast %41 : vector<4x256xf32> to vector<4x1x256xf32>
    %43 = vector.broadcast %42 : vector<4x1x256xf32> to vector<4x32x256xf32>
    %44 = arith.mulf %28, %43 : vector<4x32x256xf32>
    %c0_23 = arith.constant 0 : index
    %c0_24 = arith.constant 0 : index
    %c0_25 = arith.constant 0 : index
    %45 = vector.load %arg7[%c0_23, %c0_24, %c0_25] : memref<4x32x256xf32, #tpu.memory_space<vmem>>, vector<4x32x256xf32>
    tpu.vector_store %arg7[%c0_23, %c0_24, %c0_25], %44 {strides = array<i32>} : memref<4x32x256xf32, #tpu.memory_space<vmem>>, vector<4x32x256xf32>,
    return
  }
  func.func @transform_0(%arg0: i32) -> (i32, i32, i32) {
    %c0_i32 = arith.constant 0 : i32
    %c0_i32_0 = arith.constant 0 : i32
    %c0_i32_1 = arith.constant 0 : i32
    return %arg0, %c0_i32, %c0_i32_0 : i32, i32, i32
  }
  func.func @transform_1(%arg0: i32) -> (i32, i32) {
    %c0_i32 = arith.constant 0 : i32
    %c0_i32_0 = arith.constant 0 : i32
    %c0_i32_1 = arith.constant 0 : i32
    return %c0_i32, %c0_i32_0 : i32, i32
  }
  func.func @transform_2(%arg0: i32) -> (i32, i32) {
    %c0_i32 = arith.constant 0 : i32
    %c0_i32_0 = arith.constant 0 : i32
    %c0_i32_1 = arith.constant 0 : i32
    return %c0_i32, %c0_i32_0 : i32, i32
  }
  func.func @transform_3(%arg0: i32) -> (i32, i32) {
    %c0_i32 = arith.constant 0 : i32
    %c0_i32_0 = arith.constant 0 : i32
    %c0_i32_1 = arith.constant 0 : i32
    return %c0_i32, %c0_i32_0 : i32, i32
  }
  func.func @transform_4(%arg0: i32) -> (i32, i32) {
    %c0_i32 = arith.constant 0 : i32
    %c0_i32_0 = arith.constant 0 : i32
    %c0_i32_1 = arith.constant 0 : i32
    return %c0_i32, %c0_i32_0 : i32, i32
  }
  func.func @transform_5(%arg0: i32) -> (i32, i32) {
    %c0_i32 = arith.constant 0 : i32
    %c0_i32_0 = arith.constant 0 : i32
    %c0_i32_1 = arith.constant 0 : i32
    return %c0_i32, %c0_i32_0 : i32, i32
  }
  func.func @transform_6(%arg0: i32) -> (i32, i32, i32) {
    %c0_i32 = arith.constant 0 : i32
    %c0_i32_0 = arith.constant 0 : i32
    %c0_i32_1 = arith.constant 0 : i32
    return %arg0, %c0_i32, %c0_i32_0 : i32, i32, i32
  }
}

</mosaic_0001>

<llo_original>
// kernel: cbam_pallas.1
$region0: #{cbam_pallas.1}
  #allocation0 [shape = 'u32[]', space=smem, size = 0x4, offset = 0x4, fixed_abs, tag = 'smem constant byte address 0x4 - core index']
  #allocation1 [shape = 'u32[144,128]{1,0:T(1,128)}', space=vmem, size = 0x12000, scoped, tag = 'internal scratch']
  %s0 = inlined_call_operand.vmem [shape: f32[8,32,256], index: 0, kind: input, shape index: {}]
  %s1 = inlined_call_operand.vmem [shape: f32[32,2], index: 1, kind: input, shape index: {}]
  %s2 = inlined_call_operand.vmem [shape: f32[1,2], index: 2, kind: input, shape index: {}]
  %s3 = inlined_call_operand.vmem [shape: f32[2,32], index: 3, kind: input, shape index: {}]
  %s4 = inlined_call_operand.vmem [shape: f32[1,32], index: 4, kind: input, shape index: {}]
  %s5 = inlined_call_operand.vmem [shape: bf16[512,256], index: 5, kind: input, shape index: {}]
  %s6 = inlined_call_operand.vmem [shape: f32[8,32,256], index: 6, kind: output, shape index: {}]
  %s7 = sld [smem:[#allocation0]]
  $region57: #{cbam_pallas.1} parent=0
    _
  %s9 = ssub.s32 1, %s7
  %s10 = scalar_select 0, %s9, %s7
  loop: start=0, step=1, limit=4
  $region2: #{cbam_pallas.1} parent=0 // loop_pre_header
    _
  $region3: #{cbam_pallas.1} parent=0 // loop_header
    %s12 = sphi 0, %s16
    %p13 = scmp.ge.s32.totalorder %s12, 4
    %s22 = sphi 0, %s24
    %s25 = sphi 0, %s22
    %s26 = sphi 0, %s25
    %s42 = sphi 0, %s26
    %s46 = sphi 0, %s46
    %s48 = sphi 0, %s46
    %s49 = sphi 0, %s48
    %s63 = sphi 0, %s49
    %s67 = sphi 0, %s67
    %s69 = sphi 0, %s67
    %s70 = sphi 0, %s69
    %s84 = sphi 0, %s70
    %s88 = sphi 0, %s88
    %s90 = sphi 0, %s88
    %s91 = sphi 0, %s90
    %s105 = sphi 0, %s91
    %s109 = sphi 0, %s109
    %s111 = sphi 0, %s109
    %s112 = sphi 0, %s111
    %s126 = sphi 0, %s112
    %s130 = sphi 0, %s130
    %s132 = sphi 0, %s130
    %s133 = sphi 0, %s132
    %s147 = sphi 0, %s133
    %s153 = sphi 0, %s155
    %s156 = sphi 0, %s153
    %s157 = sphi 0, %s156
    %s173 = sphi 0, %s157
  $region4: #{cbam_pallas.1} parent=0 // loop_header_branch
    %15 = sbr.rel (%p13) target = $region8
  $region5: #{cbam_pallas.1} parent=0 // loop_body
    %s17 = ssub.s32 %s12, 1
    %s18 = ssub.s32 %s12, 2
    %s19 = sadd.s32 %s12, 1
    %s20 = ssub.s32 %s12, %s19
    %p21 = scmp.eq.s32.totalorder %s20, 0
    %s23 = sadd.s32 %s22, 1
    %s24 = scalar_select %p21, %s22, %s23
    %p27 = pneg %p21
    %p28 = scmp.eq.s32.totalorder %s12, 1
    %p29 = por %p27, %p28
    %p30 = scmp.ne.s32.totalorder %s22, %s25
    %p31 = scmp.eq.s32.totalorder %s12, 0
    %p32 = por %p30, %p31
    %p33 = scmp.ne.s32.totalorder %s22, %s25
    %p34 = scmp.eq.s32.totalorder %s17, 1
    %p35 = por %p33, %p34
    %p36 = scmp.ne.s32.totalorder %s25, %s26
    %p37 = scmp.eq.s32.totalorder %s17, 0
    %p38 = por %p36, %p37
    %p39 = scmp.ne.s32.totalorder %s25, %s26
    %p40 = scmp.eq.s32.totalorder %s18, 1
    %p41 = por %p39, %p40
    %p43 = scmp.ne.s32.totalorder %s26, %s42
    %p44 = scmp.eq.s32.totalorder %s18, 0
    %p45 = por %p43, %p44
    %s47 = sadd.s32 %s46, 1
    %p50 = scmp.eq.s32.totalorder %s12, 1
    %p51 = scmp.ne.s32.totalorder %s46, %s48
    %p52 = scmp.eq.s32.totalorder %s12, 0
    %p53 = por %p51, %p52
    %p54 = scmp.ne.s32.totalorder %s46, %s48
    %p55 = scmp.eq.s32.totalorder %s17, 1
    %p56 = por %p54, %p55
    %p57 = scmp.ne.s32.totalorder %s48, %s49
    %p58 = scmp.eq.s32.totalorder %s17, 0
    %p59 = por %p57, %p58
    %p60 = scmp.ne.s32.totalorder %s48, %s49
    %p61 = scmp.eq.s32.totalorder %s18, 1
    %p62 = por %p60, %p61
    %p64 = scmp.ne.s32.totalorder %s49, %s63
    %p65 = scmp.eq.s32.totalorder %s18, 0
    %p66 = por %p64, %p65
    %s68 = sadd.s32 %s67, 1
    %p71 = scmp.eq.s32.totalorder %s12, 1
    %p72 = scmp.ne.s32.totalorder %s67, %s69
    %p73 = scmp.eq.s32.totalorder %s12, 0
    %p74 = por %p72, %p73
    %p75 = scmp.ne.s32.totalorder %s67, %s69
    %p76 = scmp.eq.s32.totalorder %s17, 1
    %p77 = por %p75, %p76
    %p78 = scmp.ne.s32.totalorder %s69, %s70
    %p79 = scmp.eq.s32.totalorder %s17, 0
    %p80 = por %p78, %p79
    %p81 = scmp.ne.s32.totalorder %s69, %s70
    %p82 = scmp.eq.s32.totalorder %s18, 1
    %p83 = por %p81, %p82
    %p85 = scmp.ne.s32.totalorder %s70, %s84
    %p86 = scmp.eq.s32.totalorder %s18, 0
    %p87 = por %p85, %p86
    %s89 = sadd.s32 %s88, 1
    %p92 = scmp.eq.s32.totalorder %s12, 1
    %p93 = scmp.ne.s32.totalorder %s88, %s90
    %p94 = scmp.eq.s32.totalorder %s12, 0
    %p95 = por %p93, %p94
    %p96 = scmp.ne.s32.totalorder %s88, %s90
    %p97 = scmp.eq.s32.totalorder %s17, 1
    %p98 = por %p96, %p97
    %p99 = scmp.ne.s32.totalorder %s90, %s91
    %p100 = scmp.eq.s32.totalorder %s17, 0
    %p101 = por %p99, %p100
    %p102 = scmp.ne.s32.totalorder %s90, %s91
    %p103 = scmp.eq.s32.totalorder %s18, 1
    %p104 = por %p102, %p103
    %p106 = scmp.ne.s32.totalorder %s91, %s105
    %p107 = scmp.eq.s32.totalorder %s18, 0
    %p108 = por %p106, %p107
    %s110 = sadd.s32 %s109, 1
    %p113 = scmp.eq.s32.totalorder %s12, 1
    %p114 = scmp.ne.s32.totalorder %s109, %s111
    %p115 = scmp.eq.s32.totalorder %s12, 0
    %p116 = por %p114, %p115
    %p117 = scmp.ne.s32.totalorder %s109, %s111
    %p118 = scmp.eq.s32.totalorder %s17, 1
    %p119 = por %p117, %p118
    %p120 = scmp.ne.s32.totalorder %s111, %s112
    %p121 = scmp.eq.s32.totalorder %s17, 0
    %p122 = por %p120, %p121
    %p123 = scmp.ne.s32.totalorder %s111, %s112
    %p124 = scmp.eq.s32.totalorder %s18, 1
    %p125 = por %p123, %p124
    %p127 = scmp.ne.s32.totalorder %s112, %s126
    %p128 = scmp.eq.s32.totalorder %s18, 0
    %p129 = por %p127, %p128
    %s131 = sadd.s32 %s130, 1
    %p134 = scmp.eq.s32.totalorder %s12, 1
    %p135 = scmp.ne.s32.totalorder %s130, %s132
    %p136 = scmp.eq.s32.totalorder %s12, 0
    %p137 = por %p135, %p136
    %p138 = scmp.ne.s32.totalorder %s130, %s132
    %p139 = scmp.eq.s32.totalorder %s17, 1
    %p140 = por %p138, %p139
    %p141 = scmp.ne.s32.totalorder %s132, %s133
    %p142 = scmp.eq.s32.totalorder %s17, 0
    %p143 = por %p141, %p142
    %p144 = scmp.ne.s32.totalorder %s132, %s133
    %p145 = scmp.eq.s32.totalorder %s18, 1
    %p146 = por %p144, %p145
    %p148 = scmp.ne.s32.totalorder %s133, %s147
    %p149 = scmp.eq.s32.totalorder %s18, 0
    %p150 = por %p148, %p149
    %s151 = ssub.s32 %s12, %s19
    %p152 = scmp.eq.s32.totalorder %s151, 0
    %s154 = sadd.s32 %s153, 1
    %s155 = scalar_select %p152, %s153, %s154
    %p158 = pneg %p152
    %p159 = scmp.eq.s32.totalorder %s12, 1
    %p160 = por %p158, %p159
    %p161 = scmp.ne.s32.totalorder %s153, %s156
    %p162 = scmp.eq.s32.totalorder %s12, 0
    %p163 = por %p161, %p162
    %p164 = scmp.ne.s32.totalorder %s153, %s156
    %p165 = scmp.eq.s32.totalorder %s17, 1
    %p166 = por %p164, %p165
    %p167 = scmp.ne.s32.totalorder %s156, %s157
    %p168 = scmp.eq.s32.totalorder %s17, 0
    %p169 = por %p167, %p168
    %p170 = scmp.ne.s32.totalorder %s156, %s157
    %p171 = scmp.eq.s32.totalorder %s18, 1
    %p172 = por %p170, %p171
    %p174 = scmp.ne.s32.totalorder %s157, %s173
    %p175 = scmp.eq.s32.totalorder %s18, 0
    %p176 = por %p174, %p175
    %p177 = scmp.le.s32.totalorder 1, %s12
    %p178 = scmp.lt.s32.totalorder %s12, 3
    %p179 = pnand %p177, %p178
    %p180 = pneg %p179
    // Predicated region
    $region9: #{cbam_pallas.1} parent=5 // pred_check
      _
    $region10: #{cbam_pallas.1} parent=5 // pred_check_branch
      %182 = sbr.rel (%p179) target = $region12
    $region11: #{cbam_pallas.1} parent=5 // pred_region
      %s183 = ssub.s32 %s12, 1
      // Predicated region
      $region13: #{cbam_pallas.1} parent=11 // pred_check
        %p184 = pneg %p59
      $region14: #{cbam_pallas.1} parent=11 // pred_check_branch
        %186 = sbr.rel (%p184) target = $region16
      $region15: #{cbam_pallas.1} parent=11 // pred_region
        _
      $region16: #{cbam_pallas.1} parent=11 // pred_fallthru
        _
      // Predicated region
      $region17: #{cbam_pallas.1} parent=11 // pred_check
        %p187 = pneg %p80
      $region18: #{cbam_pallas.1} parent=11 // pred_check_branch
        %189 = sbr.rel (%p187) target = $region20
      $region19: #{cbam_pallas.1} parent=11 // pred_region
        _
      $region20: #{cbam_pallas.1} parent=11 // pred_fallthru
        _
      // Predicated region
      $region21: #{cbam_pallas.1} parent=11 // pred_check
        %p190 = pneg %p101
      $region22: #{cbam_pallas.1} parent=11 // pred_check_branch
        %192 = sbr.rel (%p190) target = $region24
      $region23: #{cbam_pallas.1} parent=11 // pred_region
        _
      $region24: #{cbam_pallas.1} parent=11 // pred_fallthru
        _
      // Predicated region
      $region25: #{cbam_pallas.1} parent=11 // pred_check
        %p193 = pneg %p122
      $region26: #{cbam_pallas.1} parent=11 // pred_check_branch
        %195 = sbr.rel (%p193) target = $region28
      $region27: #{cbam_pallas.1} parent=11 // pred_region
        _
      $region28: #{cbam_pallas.1} parent=11 // pred_fallthru
        _
      // Predicated region
      $region29: #{cbam_pallas.1} parent=11 // pred_check
        %p196 = pneg %p143
      $region30: #{cbam_pallas.1} parent=11 // pred_check_branch
        %198 = sbr.rel (%p196) target = $region32
      $region31: #{cbam_pallas.1} parent=11 // pred_region
        _
      $region32: #{cbam_pallas.1} parent=11 // pred_fallthru
        _
    $region12: #{cbam_pallas.1} parent=5 // pred_fallthru
      _
    %p199 = scmp.lt.s32.totalorder %s12, 2
    // Predicated region
    $region33: #{cbam_pallas.1} parent=5 // pred_check
      %p200 = pneg %p199
    $region34: #{cbam_pallas.1} parent=5 // pred_check_branch
      %202 = sbr.rel (%p200) target = $region36
    $region35: #{cbam_pallas.1} parent=5 // pred_region
      // Predicated region
      $region37: #{cbam_pallas.1} parent=35 // pred_check
        %p203 = pneg %p32
      $region38: #{cbam_pallas.1} parent=35 // pred_check_branch
        %205 = sbr.rel (%p203) target = $region40
      $region39: #{cbam_pallas.1} parent=35 // pred_region
        %s206 = smul.u32 4, %s12
        %p207 = scmp.lt.s32.totalorder %s206, 7
        %s208 = scalar_select %p207, %s206, 7
        %s209 = smul.addr %s208, 8
        %s210 = smul.addr %s209, 8
        %s211 = scalar_lea.vmem %s0, %s210
        %s212 = smul.u32 4, %s12
      $region40: #{cbam_pallas.1} parent=35 // pred_fallthru
        _
    $region36: #{cbam_pallas.1} parent=5 // pred_fallthru
      _
    %p213 = scmp.le.s32.totalorder 1, %s12
    %p214 = scmp.lt.s32.totalorder %s12, 3
    %p215 = pnand %p213, %p214
    %p216 = pneg %p215
    // Predicated region
    $region41: #{cbam_pallas.1} parent=5 // pred_check
      _
    $region42: #{cbam_pallas.1} parent=5 // pred_check_branch
      %218 = sbr.rel (%p215) target = $region44
    $region43: #{cbam_pallas.1} parent=5 // pred_region
      %s219 = ssub.s32 %s12, 1
      %s220 = smul.u32 4, %s17
      %p221 = scmp.lt.s32.totalorder %s220, 7
      %s222 = scalar_select %p221, %s220, 7
      %s223 = smul.addr %s222, 8
      %s224 = smul.addr %s223, 8
      %s225 = scalar_lea.vmem %s0, %s224
      %p226 = pneg %p38
      %p227 = pneg %p35
      %p228 = pneg %p59
      %p229 = pneg %p56
      %p230 = pneg %p80
      %p231 = pneg %p77
      %p232 = pneg %p101
      %p233 = pneg %p98
      %p234 = pneg %p122
      %p235 = pneg %p119
      %p236 = pneg %p143
      %p237 = pneg %p140
      %p238 = pneg %p169
      %p239 = pneg %p166
      %s240 = smul.u32 4, %s17
      %p241 = scmp.lt.s32.totalorder %s240, 7
      %s242 = scalar_select %p241, %s240, 7
      %s243 = smul.addr %s242, 8
      %s244 = smul.addr %s243, 8
      %s245 = scalar_lea.vmem %s6, %s244
      %s246 = smul.u32 4, %s17
      %p247 = scmp.lt.s32.totalorder %s246, 7
      %s248 = scalar_select %p247, %s246, 7
      %s249 = smul.addr %s248, 8
      %s250 = smul.addr %s249, 8
      %s251 = scalar_lea.vmem %s0, %s250
      %s252 = smul.u32 4, %s17
      %s253 = smul.u32 4, %s17
      %p254 = scmp.lt.s32.totalorder %s253, 7
      %s255 = scalar_select %p254, %s253, 7
      %s256 = smul.addr %s255, 8
      %s257 = smul.addr %s256, 8
      %s258 = scalar_lea.vmem %s6, %s257
      %s259 = smul.u32 4, %s17
      %v260 = vld [vmem:[%s251] sm:$0xff]
      %v261 = vld [vmem:[%s251 + $0x8] sm:$0xff]
      %v262 = vld [vmem:[%s251 + $0x10] sm:$0xff]
      %v263 = vld [vmem:[%s251 + $0x18] sm:$0xff]
      %v264 = vld [vmem:[%s251 + $0x20] sm:$0xff]
      %v265 = vld [vmem:[%s251 + $0x28] sm:$0xff]
      %v266 = vld [vmem:[%s251 + $0x30] sm:$0xff]
      %v267 = vld [vmem:[%s251 + $0x38] sm:$0xff]
      %v268 = vld [vmem:[%s251 + $0x40] sm:$0xff]
      %v269 = vld [vmem:[%s251 + $0x48] sm:$0xff]
      %v270 = vld [vmem:[%s251 + $0x50] sm:$0xff]
      %v271 = vld [vmem:[%s251 + $0x58] sm:$0xff]
      %v272 = vld [vmem:[%s251 + $0x60] sm:$0xff]
      %v273 = vld [vmem:[%s251 + $0x68] sm:$0xff]
      %v274 = vld [vmem:[%s251 + $0x70] sm:$0xff]
      %v275 = vld [vmem:[%s251 + $0x78] sm:$0xff]
      %v276 = vld [vmem:[%s251 + $0x80] sm:$0xff]
      %v277 = vld [vmem:[%s251 + $0x88] sm:$0xff]
      %v278 = vld [vmem:[%s251 + $0x90] sm:$0xff]
      %v279 = vld [vmem:[%s251 + $0x98] sm:$0xff]
      %v280 = vld [vmem:[%s251 + $0xa0] sm:$0xff]
      %v281 = vld [vmem:[%s251 + $0xa8] sm:$0xff]
      %v282 = vld [vmem:[%s251 + $0xb0] sm:$0xff]
      %v283 = vld [vmem:[%s251 + $0xb8] sm:$0xff]
      %v284 = vld [vmem:[%s251 + $0xc0] sm:$0xff]
      %v285 = vld [vmem:[%s251 + $0xc8] sm:$0xff]
      %v286 = vld [vmem:[%s251 + $0xd0] sm:$0xff]
      %v287 = vld [vmem:[%s251 + $0xd8] sm:$0xff]
      %v288 = vld [vmem:[%s251 + $0xe0] sm:$0xff]
      %v289 = vld [vmem:[%s251 + $0xe8] sm:$0xff]
      %v290 = vld [vmem:[%s251 + $0xf0] sm:$0xff]
      %v291 = vld [vmem:[%s251 + $0xf8] sm:$0xff]
      %v292 = vmax.f32 %v260, %v261
      %293 = vmax.xlane.f32.xlu0 %v292
      %v294 = vpop.xlane.xlu0 %293
      %v295 = vmax.f32 %v262, %v263
      %296 = vmax.xlane.f32.xlu0 %v295
      %v297 = vpop.xlane.xlu0 %296
      %v298 = vmax.f32 %v264, %v265
      %299 = vmax.xlane.f32.xlu0 %v298
      %v300 = vpop.xlane.xlu0 %299
      %v301 = vmax.f32 %v266, %v267
      %302 = vmax.xlane.f32.xlu0 %v301
      %v303 = vpop.xlane.xlu0 %302
      %v304 = vmax.f32 %v268, %v269
      %305 = vmax.xlane.f32.xlu0 %v304
      %v306 = vpop.xlane.xlu0 %305
      %v307 = vmax.f32 %v270, %v271
      %308 = vmax.xlane.f32.xlu0 %v307
      %v309 = vpop.xlane.xlu0 %308
      %v310 = vmax.f32 %v272, %v273
      %311 = vmax.xlane.f32.xlu0 %v310
      %v312 = vpop.xlane.xlu0 %311
      %v313 = vmax.f32 %v274, %v275
      %314 = vmax.xlane.f32.xlu0 %v313
      %v315 = vpop.xlane.xlu0 %314
      %v316 = vmax.f32 %v276, %v277
      %317 = vmax.xlane.f32.xlu0 %v316
      %v318 = vpop.xlane.xlu0 %317
      %v319 = vmax.f32 %v278, %v279
      %320 = vmax.xlane.f32.xlu0 %v319
      %v321 = vpop.xlane.xlu0 %320
      %v322 = vmax.f32 %v280, %v281
      %323 = vmax.xlane.f32.xlu0 %v322
      %v324 = vpop.xlane.xlu0 %323
      %v325 = vmax.f32 %v282, %v283
      %326 = vmax.xlane.f32.xlu0 %v325
      %v327 = vpop.xlane.xlu0 %326
      %v328 = vmax.f32 %v284, %v285
      %329 = vmax.xlane.f32.xlu0 %v328
      %v330 = vpop.xlane.xlu0 %329
      %v331 = vmax.f32 %v286, %v287
      %332 = vmax.xlane.f32.xlu0 %v331
      %v333 = vpop.xlane.xlu0 %332
      %v334 = vmax.f32 %v288, %v289
      %335 = vmax.xlane.f32.xlu0 %v334
      %v336 = vpop.xlane.xlu0 %335
      %v337 = vmax.f32 %v290, %v291
      %338 = vmax.xlane.f32.xlu0 %v337
      %v339 = vpop.xlane.xlu0 %338
      %v340 = vadd.f32 %v260, %v261
      %341 = vadd.xlane.f32.xlu0 %v340
      %v342 = vpop.xlane.xlu0 %341
      %v343 = vadd.f32 %v262, %v263
      %344 = vadd.xlane.f32.xlu0 %v343
      %v345 = vpop.xlane.xlu0 %344
      %v346 = vadd.f32 %v264, %v265
      %347 = vadd.xlane.f32.xlu0 %v346
      %v348 = vpop.xlane.xlu0 %347
      %v349 = vadd.f32 %v266, %v267
      %350 = vadd.xlane.f32.xlu0 %v349
      %v351 = vpop.xlane.xlu0 %350
      %v352 = vadd.f32 %v268, %v269
      %353 = vadd.xlane.f32.xlu0 %v352
      %v354 = vpop.xlane.xlu0 %353
      %v355 = vadd.f32 %v270, %v271
      %356 = vadd.xlane.f32.xlu0 %v355
      %v357 = vpop.xlane.xlu0 %356
      %v358 = vadd.f32 %v272, %v273
      %359 = vadd.xlane.f32.xlu0 %v358
      %v360 = vpop.xlane.xlu0 %359
      %v361 = vadd.f32 %v274, %v275
      %362 = vadd.xlane.f32.xlu0 %v361
      %v363 = vpop.xlane.xlu0 %362
      %v364 = vadd.f32 %v276, %v277
      %365 = vadd.xlane.f32.xlu0 %v364
      %v366 = vpop.xlane.xlu0 %365
      %v367 = vadd.f32 %v278, %v279
      %368 = vadd.xlane.f32.xlu0 %v367
      %v369 = vpop.xlane.xlu0 %368
      %v370 = vadd.f32 %v280, %v281
      %371 = vadd.xlane.f32.xlu0 %v370
      %v372 = vpop.xlane.xlu0 %371
      %v373 = vadd.f32 %v282, %v283
      %374 = vadd.xlane.f32.xlu0 %v373
      %v375 = vpop.xlane.xlu0 %374
      %v376 = vadd.f32 %v284, %v285
      %377 = vadd.xlane.f32.xlu0 %v376
      %v378 = vpop.xlane.xlu0 %377
      %v379 = vadd.f32 %v286, %v287
      %380 = vadd.xlane.f32.xlu0 %v379
      %v381 = vpop.xlane.xlu0 %380
      %v382 = vadd.f32 %v288, %v289
      %383 = vadd.xlane.f32.xlu0 %v382
      %v384 = vpop.xlane.xlu0 %383
      %v385 = vadd.f32 %v290, %v291
      %386 = vadd.xlane.f32.xlu0 %v385
      %v387 = vpop.xlane.xlu0 %386
      %v388 = vmul.f32 %v342, 0.00390625
      %v389 = vmul.f32 %v345, 0.00390625
      %v390 = vmul.f32 %v348, 0.00390625
      %v391 = vmul.f32 %v351, 0.00390625
      %v392 = vmul.f32 %v354, 0.00390625
      %v393 = vmul.f32 %v357, 0.00390625
      %v394 = vmul.f32 %v360, 0.00390625
      %v395 = vmul.f32 %v363, 0.00390625
      %v396 = vmul.f32 %v366, 0.00390625
      %v397 = vmul.f32 %v369, 0.00390625
      %v398 = vmul.f32 %v372, 0.00390625
      %v399 = vmul.f32 %v375, 0.00390625
      %v400 = vmul.f32 %v378, 0.00390625
      %v401 = vmul.f32 %v381, 0.00390625
      %v402 = vmul.f32 %v384, 0.00390625
      %v403 = vmul.f32 %v387, 0.00390625
      %v420 = vlaneseq
      %v421 = vand.u32 %v420, 127
      %v422 = vlaneseq
      %v423 = vshrl.u32 %v422, 7
      %v424 = vsub.s32 %v421, %v423
      %v425 = vrot.slane %v294, %v424
      %v426 = vadd.s32 %v421, 4294967288
      %v427 = vlaneseq
      %v428 = vshrl.u32 %v427, 7
      %v429 = vsub.s32 %v426, %v428
      %v430 = vrot.slane %v297, %v429
      %vm431 = vcmask 130112
      %v432 = vsel %vm431, %v430, %v425
      %v433 = vadd.s32 %v421, 4294967280
      %v434 = vlaneseq
      %v435 = vshrl.u32 %v434, 7
      %v436 = vsub.s32 %v433, %v435
      %v437 = vrot.slane %v300, %v436
      %vm438 = vcmask 195712
      %v439 = vsel %vm438, %v437, %v432
      %v440 = vadd.s32 %v421, 4294967272
      %v441 = vlaneseq
      %v442 = vshrl.u32 %v441, 7
      %v443 = vsub.s32 %v440, %v442
      %v444 = vrot.slane %v303, %v443
      %vm445 = vcmask 261312
      %v446 = vsel %vm445, %v444, %v439
      %v447 = vlaneseq
      %v448 = vshrl.u32 %v447, 7
      %v449 = vsub.s32 %v421, %v448
      %v450 = vrot.slane %v306, %v449
      %v451 = vlaneseq
      %v452 = vshrl.u32 %v451, 7
      %v453 = vsub.s32 %v426, %v452
      %v454 = vrot.slane %v309, %v453
      %v455 = vsel %vm431, %v454, %v450
      %v456 = vlaneseq
      %v457 = vshrl.u32 %v456, 7
      %v458 = vsub.s32 %v433, %v457
      %v459 = vrot.slane %v312, %v458
      %v460 = vsel %vm438, %v459, %v455
      %v461 = vlaneseq
      %v462 = vshrl.u32 %v461, 7
      %v463 = vsub.s32 %v440, %v462
      %v464 = vrot.slane %v315, %v463
      %v465 = vsel %vm445, %v464, %v460
      %v466 = vlaneseq
      %v467 = vshrl.u32 %v466, 7
      %v468 = vsub.s32 %v421, %v467
      %v469 = vrot.slane %v318, %v468
      %v470 = vlaneseq
      %v471 = vshrl.u32 %v470, 7
      %v472 = vsub.s32 %v426, %v471
      %v473 = vrot.slane %v321, %v472
      %v474 = vsel %vm431, %v473, %v469
      %v475 = vlaneseq
      %v476 = vshrl.u32 %v475, 7
      %v477 = vsub.s32 %v433, %v476
      %v478 = vrot.slane %v324, %v477
      %v479 = vsel %vm438, %v478, %v474
      %v480 = vlaneseq
      %v481 = vshrl.u32 %v480, 7
      %v482 = vsub.s32 %v440, %v481
      %v483 = vrot.slane %v327, %v482
      %v484 = vsel %vm445, %v483, %v479
      %v485 = vlaneseq
      %v486 = vshrl.u32 %v485, 7
      %v487 = vsub.s32 %v421, %v486
      %v488 = vrot.slane %v330, %v487
      %v489 = vlaneseq
      %v490 = vshrl.u32 %v489, 7
      %v491 = vsub.s32 %v426, %v490
      %v492 = vrot.slane %v333, %v491
      %v493 = vsel %vm431, %v492, %v488
      %v494 = vlaneseq
      %v495 = vshrl.u32 %v494, 7
      %v496 = vsub.s32 %v433, %v495
      %v497 = vrot.slane %v336, %v496
      %v498 = vsel %vm438, %v497, %v493
      %v499 = vlaneseq
      %v500 = vshrl.u32 %v499, 7
      %v501 = vsub.s32 %v440, %v500
      %v502 = vrot.slane %v339, %v501
      %v503 = vsel %vm445, %v502, %v498
      %vm504 = vcmask 1041409
      %v505 = vsel %vm504, %v465, %v446
      %vm506 = vcmask 1042434
      %v507 = vsel %vm506, %v484, %v505
      %vm508 = vcmask 1043459
      %v509 = vsel %vm508, %v503, %v507
      %v527 = vlaneseq
      %v528 = vshrl.u32 %v527, 7
      %v529 = vsub.s32 %v421, %v528
      %v530 = vrot.slane %v388, %v529
      %v531 = vlaneseq
      %v532 = vshrl.u32 %v531, 7
      %v533 = vsub.s32 %v426, %v532
      %v534 = vrot.slane %v389, %v533
      %v535 = vsel %vm431, %v534, %v530
      %v536 = vlaneseq
      %v537 = vshrl.u32 %v536, 7
      %v538 = vsub.s32 %v433, %v537
      %v539 = vrot.slane %v390, %v538
      %v540 = vsel %vm438, %v539, %v535
      %v541 = vlaneseq
      %v542 = vshrl.u32 %v541, 7
      %v543 = vsub.s32 %v440, %v542
      %v544 = vrot.slane %v391, %v543
      %v545 = vsel %vm445, %v544, %v540
      %v546 = vlaneseq
      %v547 = vshrl.u32 %v546, 7
      %v548 = vsub.s32 %v421, %v547
      %v549 = vrot.slane %v392, %v548
      %v550 = vlaneseq
      %v551 = vshrl.u32 %v550, 7
      %v552 = vsub.s32 %v426, %v551
      %v553 = vrot.slane %v393, %v552
      %v554 = vsel %vm431, %v553, %v549
      %v555 = vlaneseq
      %v556 = vshrl.u32 %v555, 7
      %v557 = vsub.s32 %v433, %v556
      %v558 = vrot.slane %v394, %v557
      %v559 = vsel %vm438, %v558, %v554
      %v560 = vlaneseq
      %v561 = vshrl.u32 %v560, 7
      %v562 = vsub.s32 %v440, %v561
      %v563 = vrot.slane %v395, %v562
      %v564 = vsel %vm445, %v563, %v559
      %v565 = vlaneseq
      %v566 = vshrl.u32 %v565, 7
      %v567 = vsub.s32 %v421, %v566
      %v568 = vrot.slane %v396, %v567
      %v569 = vlaneseq
      %v570 = vshrl.u32 %v569, 7
      %v571 = vsub.s32 %v426, %v570
      %v572 = vrot.slane %v397, %v571
      %v573 = vsel %vm431, %v572, %v568
      %v574 = vlaneseq
      %v575 = vshrl.u32 %v574, 7
      %v576 = vsub.s32 %v433, %v575
      %v577 = vrot.slane %v398, %v576
      %v578 = vsel %vm438, %v577, %v573
      %v579 = vlaneseq
      %v580 = vshrl.u32 %v579, 7
      %v581 = vsub.s32 %v440, %v580
      %v582 = vrot.slane %v399, %v581
      %v583 = vsel %vm445, %v582, %v578
      %v584 = vlaneseq
      %v585 = vshrl.u32 %v584, 7
      %v586 = vsub.s32 %v421, %v585
      %v587 = vrot.slane %v400, %v586
      %v588 = vlaneseq
      %v589 = vshrl.u32 %v588, 7
      %v590 = vsub.s32 %v426, %v589
      %v591 = vrot.slane %v401, %v590
      %v592 = vsel %vm431, %v591, %v587
      %v593 = vlaneseq
      %v594 = vshrl.u32 %v593, 7
      %v595 = vsub.s32 %v433, %v594
      %v596 = vrot.slane %v402, %v595
      %v597 = vsel %vm438, %v596, %v592
      %v598 = vlaneseq
      %v599 = vshrl.u32 %v598, 7
      %v600 = vsub.s32 %v440, %v599
      %v601 = vrot.slane %v403, %v600
      %v602 = vsel %vm445, %v601, %v597
      %vm603 = vcmask 1045509
      %v604 = vsel %vm603, %v564, %v545
      %vm605 = vcmask 1046534
      %v606 = vsel %vm605, %v583, %v604
      %vm607 = vcmask 1047559
      %v608 = vsel %vm607, %v602, %v606
      %vm610 = vcmask 1043456
      %v611 = vsel %vm610, %v509, %v608
      %v612 = vld [vmem:[%s1] sm:$0xff]
      %v613 = vld [vmem:[%s1 + $0x8] sm:$0xff]
      %v614 = vld [vmem:[%s1 + $0x10] sm:$0xff]
      %v615 = vld [vmem:[%s1 + $0x18] sm:$0xff]
      %v616 = vld [vmem:[%s2] sm:$0x1]
      %v618 = vlaneseq
      %v619 = vshrl.u32 %v618, 7
      %v620 = vsub.s32 0, %v619
      %v621 = vrot.slane %v616, %v620
      %vm623 = vcmask 261120
      %v625 = vsel %vm623, %v611, 0
      %627 = vmatprep.subr.mxu0 0.0
      %628 = vmatpush1.msra.mxu0 %v612
      %629 = vmatprep.subr.mxu0 0.0
      %630 = vmatpush1.msra.mxu0 %v613
      %631 = vmatprep.subr.mxu0 0.0
      %632 = vmatpush1.msra.mxu0 %v614
      %633 = vmatprep.subr.mxu0 0.0
      %634 = vmatpush1.msra.mxu0 %v615
      %635 = vmatprep.subr.mxu0 0.0
      %636 = vmatpush1.msra.mxu0 0.0
      %637 = vmatprep.subr.mxu0 0.0
      %638 = vmatpush1.msra.mxu0 0.0
      %639 = vmatprep.subr.mxu0 0.0
      %640 = vmatpush1.msra.mxu0 0.0
      %641 = vmatprep.subr.mxu0 0.0
      %642 = vmatpush1.msra.mxu0 0.0
      %643 = vmatprep.subr.mxu0 0.0
      %644 = vmatpush1.msra.mxu0 0.0
      %645 = vmatprep.subr.mxu0 0.0
      %646 = vmatpush1.msra.mxu0 0.0
      %647 = vmatprep.subr.mxu0 0.0
      %648 = vmatpush1.msra.mxu0 0.0
      %649 = vmatprep.subr.mxu0 0.0
      %650 = vmatpush1.msra.mxu0 0.0
      %651 = vmatprep.subr.mxu0 0.0
      %652 = vmatpush1.msra.mxu0 0.0
      %653 = vmatprep.subr.mxu0 0.0
      %654 = vmatpush1.msra.mxu0 0.0
      %655 = vmatprep.subr.mxu0 0.0
      %656 = vmatpush1.msra.mxu0 0.0
      %657 = vmatprep.subr.mxu0 0.0
      %658 = vmatpush1.msra.mxu0 0.0
      %659 = vmatprep.subr.mxu0 0.0
      %660 = vmatpush1.msra.mxu0 0.0
      %661 = vmatprep.subr.mxu0 0.0
      %662 = vmatpush1.msra.mxu0 0.0
      %663 = vmatprep.subr.mxu0 0.0
      %664 = vmatpush1.msra.mxu0 0.0
      %665 = vmatprep.subr.mxu0 0.0
      %666 = vmatpush1.msra.mxu0 0.0
      %667 = vmatprep.subr.mxu0 0.0
      %668 = vmatpush1.msra.mxu0 0.0
      %669 = vmatprep.subr.mxu0 0.0
      %670 = vmatpush1.msra.mxu0 0.0
      %671 = vmatprep.subr.mxu0 0.0
      %672 = vmatpush1.msra.mxu0 0.0
      %673 = vmatprep.subr.mxu0 0.0
      %674 = vmatpush1.msra.mxu0 0.0
      %675 = vmatprep.subr.mxu0 0.0
      %676 = vmatpush1.msra.mxu0 0.0
      %677 = vmatprep.subr.mxu0 0.0
      %678 = vmatpush1.msra.mxu0 0.0
      %679 = vmatprep.subr.mxu0 0.0
      %680 = vmatpush1.msra.mxu0 0.0
      %681 = vmatprep.subr.mxu0 0.0
      %682 = vmatpush1.msra.mxu0 0.0
      %683 = vmatprep.subr.mxu0 0.0
      %684 = vmatpush1.msra.mxu0 0.0
      %685 = vmatprep.subr.mxu0 0.0
      %686 = vmatpush1.msra.mxu0 0.0
      %687 = vmatprep.subr.mxu0 0.0
      %688 = vmatpush1.msra.mxu0 0.0
      %689 = vmatprep.subr.mxu0 0.0
      %690 = vmatpush1.msra.mxu0 0.0
      %691 = vmatprep.mubr.f32.mxu0 0.0
      %692 = vmatmul.mubr.f32.gmra.mrb[0].mxu0 %v625
      %v693 = vpop.f32.mrb[0].mxu0
      %v694 = vadd.f32 %v621, %v693
      %v695 = vpop.f32.mrb[0].mxu0
      %696 = vdwg.mxu0
      %v697 = vmax.f32 %v694, 0.0
      %v698 = vld [vmem:[%s3] sm:$0x3]
      %v699 = vld [vmem:[%s4] sm:$0x1]
      %v701 = vlaneseq
      %v702 = vshrl.u32 %v701, 7
      %v703 = vsub.s32 0, %v702
      %v704 = vrot.slane %v699, %v703
      %vm706 = vcmask 15360
      %v708 = vsel %vm706, %v697, 0
      %vm710 = vcmask 1041408
      %v712 = vsel %vm710, %v698, 0
      %714 = vmatprep.subr.mxu0 0.0
      %715 = vmatpush1.msra.mxu0 %v712
      %716 = vmatprep.subr.mxu0 0.0
      %717 = vmatpush1.msra.mxu0 0.0
      %718 = vmatprep.subr.mxu0 0.0
      %719 = vmatpush1.msra.mxu0 0.0
      %720 = vmatprep.subr.mxu0 0.0
      %721 = vmatpush1.msra.mxu0 0.0
      %722 = vmatprep.subr.mxu0 0.0
      %723 = vmatpush1.msra.mxu0 0.0
      %724 = vmatprep.subr.mxu0 0.0
      %725 = vmatpush1.msra.mxu0 0.0
      %726 = vmatprep.subr.mxu0 0.0
      %727 = vmatpush1.msra.mxu0 0.0
      %728 = vmatprep.subr.mxu0 0.0
      %729 = vmatpush1.msra.mxu0 0.0
      %730 = vmatprep.subr.mxu0 0.0
      %731 = vmatpush1.msra.mxu0 0.0
      %732 = vmatprep.subr.mxu0 0.0
      %733 = vmatpush1.msra.mxu0 0.0
      %734 = vmatprep.subr.mxu0 0.0
      %735 = vmatpush1.msra.mxu0 0.0
      %736 = vmatprep.subr.mxu0 0.0
      %737 = vmatpush1.msra.mxu0 0.0
      %738 = vmatprep.subr.mxu0 0.0
      %739 = vmatpush1.msra.mxu0 0.0
      %740 = vmatprep.subr.mxu0 0.0
      %741 = vmatpush1.msra.mxu0 0.0
      %742 = vmatprep.subr.mxu0 0.0
      %743 = vmatpush1.msra.mxu0 0.0
      %744 = vmatprep.subr.mxu0 0.0
      %745 = vmatpush1.msra.mxu0 0.0
      %746 = vmatprep.subr.mxu0 0.0
      %747 = vmatpush1.msra.mxu0 0.0
      %748 = vmatprep.subr.mxu0 0.0
      %749 = vmatpush1.msra.mxu0 0.0
      %750 = vmatprep.subr.mxu0 0.0
      %751 = vmatpush1.msra.mxu0 0.0
      %752 = vmatprep.subr.mxu0 0.0
      %753 = vmatpush1.msra.mxu0 0.0
      %754 = vmatprep.subr.mxu0 0.0
      %755 = vmatpush1.msra.mxu0 0.0
      %756 = vmatprep.subr.mxu0 0.0
      %757 = vmatpush1.msra.mxu0 0.0
      %758 = vmatprep.subr.mxu0 0.0
      %759 = vmatpush1.msra.mxu0 0.0
      %760 = vmatprep.subr.mxu0 0.0
      %761 = vmatpush1.msra.mxu0 0.0
      %762 = vmatprep.subr.mxu0 0.0
      %763 = vmatpush1.msra.mxu0 0.0
      %764 = vmatprep.subr.mxu0 0.0
      %765 = vmatpush1.msra.mxu0 0.0
      %766 = vmatprep.subr.mxu0 0.0
      %767 = vmatpush1.msra.mxu0 0.0
      %768 = vmatprep.subr.mxu0 0.0
      %769 = vmatpush1.msra.mxu0 0.0
      %770 = vmatprep.subr.mxu0 0.0
      %771 = vmatpush1.msra.mxu0 0.0
      %772 = vmatprep.subr.mxu0 0.0
      %773 = vmatpush1.msra.mxu0 0.0
      %774 = vmatprep.subr.mxu0 0.0
      %775 = vmatpush1.msra.mxu0 0.0
      %776 = vmatprep.subr.mxu0 0.0
      %777 = vmatpush1.msra.mxu0 0.0
      %778 = vmatprep.mubr.f32.mxu0 0.0
      %779 = vmatmul.mubr.f32.gmra.mrb[0].mxu0 %v708
      %v780 = vpop.f32.mrb[0].mxu0
      %v781 = vadd.f32 %v704, %v780
      %v782 = vpop.f32.mrb[0].mxu0
      %783 = vdwg.mxu0
      %v785 = vrot.slane %v781, 4
      %v787 = vadd.f32 %v781, %v785
      %v788 = vxor.u32 %v787, 2147483648
      %v789 = vmul.f32 %v788, 1.442695
      %v790 = vpow.pop %v789
      %v791 = vadd.f32 %v790, 1.0
      %v792 = vrcp.pop %v791
      %v793 = vmul.f32 1.0, %v792
      %v794 = vlaneseq
      %v795 = vshrl.u32 %v794, 7
      %v796 = vsub.s32 0, %v795
      %v797 = vrot.slane %v793, %v796
      %799 = vbcast.lane.b32.xlu0 %v797, 256
      %v800 = vpop.permute.xlu0 %799
      %s802 = sor.u32 256, 8
      %803 = vbcast.lane.b32.xlu0 %v797, %s802
      %v804 = vpop.permute.xlu0 %803
      %s806 = sor.u32 256, 16
      %807 = vbcast.lane.b32.xlu0 %v797, %s806
      %v808 = vpop.permute.xlu0 %807
      %s810 = sor.u32 256, 24
      %811 = vbcast.lane.b32.xlu0 %v797, %s810
      %v812 = vpop.permute.xlu0 %811
      %v813 = vlaneseq
      %v814 = vshrl.u32 %v813, 7
      %v815 = vsub.s32 1, %v814
      %v816 = vrot.slane %v793, %v815
      %818 = vbcast.lane.b32.xlu0 %v816, 256
      %v819 = vpop.permute.xlu0 %818
      %s821 = sor.u32 256, 8
      %822 = vbcast.lane.b32.xlu0 %v816, %s821
      %v823 = vpop.permute.xlu0 %822
      %s825 = sor.u32 256, 16
      %826 = vbcast.lane.b32.xlu0 %v816, %s825
      %v827 = vpop.permute.xlu0 %826
      %s829 = sor.u32 256, 24
      %830 = vbcast.lane.b32.xlu0 %v816, %s829
      %v831 = vpop.permute.xlu0 %830
      %v832 = vlaneseq
      %v833 = vshrl.u32 %v832, 7
      %v834 = vsub.s32 2, %v833
      %v835 = vrot.slane %v793, %v834
      %837 = vbcast.lane.b32.xlu0 %v835, 256
      %v838 = vpop.permute.xlu0 %837
      %s840 = sor.u32 256, 8
      %841 = vbcast.lane.b32.xlu0 %v835, %s840
      %v842 = vpop.permute.xlu0 %841
      %s844 = sor.u32 256, 16
      %845 = vbcast.lane.b32.xlu0 %v835, %s844
      %v846 = vpop.permute.xlu0 %845
      %s848 = sor.u32 256, 24
      %849 = vbcast.lane.b32.xlu0 %v835, %s848
      %v850 = vpop.permute.xlu0 %849
      %v851 = vlaneseq
      %v852 = vshrl.u32 %v851, 7
      %v853 = vsub.s32 3, %v852
      %v854 = vrot.slane %v793, %v853
      %856 = vbcast.lane.b32.xlu0 %v854, 256
      %v857 = vpop.permute.xlu0 %856
      %s859 = sor.u32 256, 8
      %860 = vbcast.lane.b32.xlu0 %v854, %s859
      %v861 = vpop.permute.xlu0 %860
      %s863 = sor.u32 256, 16
      %864 = vbcast.lane.b32.xlu0 %v854, %s863
      %v865 = vpop.permute.xlu0 %864
      %s867 = sor.u32 256, 24
      %868 = vbcast.lane.b32.xlu0 %v854, %s867
      %v869 = vpop.permute.xlu0 %868
      %v870 = vmul.f32 %v260, %v800
      %v871 = vmul.f32 %v261, %v800
      %v872 = vmul.f32 %v262, %v804
      %v873 = vmul.f32 %v263, %v804
      %v874 = vmul.f32 %v264, %v808
      %v875 = vmul.f32 %v265, %v808
      %v876 = vmul.f32 %v266, %v812
      %v877 = vmul.f32 %v267, %v812
      %v878 = vmul.f32 %v268, %v819
      %v879 = vmul.f32 %v269, %v819
      %v880 = vmul.f32 %v270, %v823
      %v881 = vmul.f32 %v271, %v823
      %v882 = vmul.f32 %v272, %v827
      %v883 = vmul.f32 %v273, %v827
      %v884 = vmul.f32 %v274, %v831
      %v885 = vmul.f32 %v275, %v831
      %v886 = vmul.f32 %v276, %v838
      %v887 = vmul.f32 %v277, %v838
      %v888 = vmul.f32 %v278, %v842
      %v889 = vmul.f32 %v279, %v842
      %v890 = vmul.f32 %v280, %v846
      %v891 = vmul.f32 %v281, %v846
      %v892 = vmul.f32 %v282, %v850
      %v893 = vmul.f32 %v283, %v850
      %v894 = vmul.f32 %v284, %v857
      %v895 = vmul.f32 %v285, %v857
      %v896 = vmul.f32 %v286, %v861
      %v897 = vmul.f32 %v287, %v861
      %v898 = vmul.f32 %v288, %v865
      %v899 = vmul.f32 %v289, %v865
      %v900 = vmul.f32 %v290, %v869
      %v901 = vmul.f32 %v291, %v869
      %v902 = vmax.f32 %v870, %v872
      %v903 = vmax.f32 %v902, %v874
      %v904 = vmax.f32 %v903, %v876
      %v905 = vrot.slane %v904, 4
      %v906 = vmax.f32 %v904, %v905
      %v907 = vrot.slane %v906, 2
      %v908 = vmax.f32 %v906, %v907
      %v909 = vrot.slane %v908, 1
      %v910 = vmax.f32 %v908, %v909
      %v911 = vmax.f32 %v871, %v873
      %v912 = vmax.f32 %v911, %v875
      %v913 = vmax.f32 %v912, %v877
      %v914 = vrot.slane %v913, 4
      %v915 = vmax.f32 %v913, %v914
      %v916 = vrot.slane %v915, 2
      %v917 = vmax.f32 %v915, %v916
      %v918 = vrot.slane %v917, 1
      %v919 = vmax.f32 %v917, %v918
      %v920 = vmax.f32 %v878, %v880
      %v921 = vmax.f32 %v920, %v882
      %v922 = vmax.f32 %v921, %v884
      %v923 = vrot.slane %v922, 4
      %v924 = vmax.f32 %v922, %v923
      %v925 = vrot.slane %v924, 2
      %v926 = vmax.f32 %v924, %v925
      %v927 = vrot.slane %v926, 1
      %v928 = vmax.f32 %v926, %v927
      %v929 = vmax.f32 %v879, %v881
      %v930 = vmax.f32 %v929, %v883
      %v931 = vmax.f32 %v930, %v885
      %v932 = vrot.slane %v931, 4
      %v933 = vmax.f32 %v931, %v932
      %v934 = vrot.slane %v933, 2
      %v935 = vmax.f32 %v933, %v934
      %v936 = vrot.slane %v935, 1
      %v937 = vmax.f32 %v935, %v936
      %v938 = vmax.f32 %v886, %v888
      %v939 = vmax.f32 %v938, %v890
      %v940 = vmax.f32 %v939, %v892
      %v941 = vrot.slane %v940, 4
      %v942 = vmax.f32 %v940, %v941
      %v943 = vrot.slane %v942, 2
      %v944 = vmax.f32 %v942, %v943
      %v945 = vrot.slane %v944, 1
      %v946 = vmax.f32 %v944, %v945
      %v947 = vmax.f32 %v887, %v889
      %v948 = vmax.f32 %v947, %v891
      %v949 = vmax.f32 %v948, %v893
      %v950 = vrot.slane %v949, 4
      %v951 = vmax.f32 %v949, %v950
      %v952 = vrot.slane %v951, 2
      %v953 = vmax.f32 %v951, %v952
      %v954 = vrot.slane %v953, 1
      %v955 = vmax.f32 %v953, %v954
      %v956 = vmax.f32 %v894, %v896
      %v957 = vmax.f32 %v956, %v898
      %v958 = vmax.f32 %v957, %v900
      %v959 = vrot.slane %v958, 4
      %v960 = vmax.f32 %v958, %v959
      %v961 = vrot.slane %v960, 2
      %v962 = vmax.f32 %v960, %v961
      %v963 = vrot.slane %v962, 1
      %v964 = vmax.f32 %v962, %v963
      %v965 = vmax.f32 %v895, %v897
      %v966 = vmax.f32 %v965, %v899
      %v967 = vmax.f32 %v966, %v901
      %v968 = vrot.slane %v967, 4
      %v969 = vmax.f32 %v967, %v968
      %v970 = vrot.slane %v969, 2
      %v971 = vmax.f32 %v969, %v970
      %v972 = vrot.slane %v971, 1
      %v973 = vmax.f32 %v971, %v972
      %v974 = vadd.f32 %v870, %v872
      %v975 = vadd.f32 %v974, %v874
      %v976 = vadd.f32 %v975, %v876
      %v977 = vrot.slane %v976, 4
      %v978 = vadd.f32 %v976, %v977
      %v979 = vrot.slane %v978, 2
      %v980 = vadd.f32 %v978, %v979
      %v981 = vrot.slane %v980, 1
      %v982 = vadd.f32 %v980, %v981
      %v983 = vadd.f32 %v871, %v873
      %v984 = vadd.f32 %v983, %v875
      %v985 = vadd.f32 %v984, %v877
      %v986 = vrot.slane %v985, 4
      %v987 = vadd.f32 %v985, %v986
      %v988 = vrot.slane %v987, 2
      %v989 = vadd.f32 %v987, %v988
      %v990 = vrot.slane %v989, 1
      %v991 = vadd.f32 %v989, %v990
      %v992 = vadd.f32 %v878, %v880
      %v993 = vadd.f32 %v992, %v882
      %v994 = vadd.f32 %v993, %v884
      %v995 = vrot.slane %v994, 4
      %v996 = vadd.f32 %v994, %v995
      %v997 = vrot.slane %v996, 2
      %v998 = vadd.f32 %v996, %v997
      %v999 = vrot.slane %v998, 1
      %v1000 = vadd.f32 %v998, %v999
      %v1001 = vadd.f32 %v879, %v881
      %v1002 = vadd.f32 %v1001, %v883
      %v1003 = vadd.f32 %v1002, %v885
      %v1004 = vrot.slane %v1003, 4
      %v1005 = vadd.f32 %v1003, %v1004
      %v1006 = vrot.slane %v1005, 2
      %v1007 = vadd.f32 %v1005, %v1006
      %v1008 = vrot.slane %v1007, 1
      %v1009 = vadd.f32 %v1007, %v1008
      %v1010 = vadd.f32 %v886, %v888
      %v1011 = vadd.f32 %v1010, %v890
      %v1012 = vadd.f32 %v1011, %v892
      %v1013 = vrot.slane %v1012, 4
      %v1014 = vadd.f32 %v1012, %v1013
      %v1015 = vrot.slane %v1014, 2
      %v1016 = vadd.f32 %v1014, %v1015
      %v1017 = vrot.slane %v1016, 1
      %v1018 = vadd.f32 %v1016, %v1017
      %v1019 = vadd.f32 %v887, %v889
      %v1020 = vadd.f32 %v1019, %v891
      %v1021 = vadd.f32 %v1020, %v893
      %v1022 = vrot.slane %v1021, 4
      %v1023 = vadd.f32 %v1021, %v1022
      %v1024 = vrot.slane %v1023, 2
      %v1025 = vadd.f32 %v1023, %v1024
      %v1026 = vrot.slane %v1025, 1
      %v1027 = vadd.f32 %v1025, %v1026
      %v1028 = vadd.f32 %v894, %v896
      %v1029 = vadd.f32 %v1028, %v898
      %v1030 = vadd.f32 %v1029, %v900
      %v1031 = vrot.slane %v1030, 4
      %v1032 = vadd.f32 %v1030, %v1031
      %v1033 = vrot.slane %v1032, 2
      %v1034 = vadd.f32 %v1032, %v1033
      %v1035 = vrot.slane %v1034, 1
      %v1036 = vadd.f32 %v1034, %v1035
      %v1037 = vadd.f32 %v895, %v897
      %v1038 = vadd.f32 %v1037, %v899
      %v1039 = vadd.f32 %v1038, %v901
      %v1040 = vrot.slane %v1039, 4
      %v1041 = vadd.f32 %v1039, %v1040
      %v1042 = vrot.slane %v1041, 2
      %v1043 = vadd.f32 %v1041, %v1042
      %v1044 = vrot.slane %v1043, 1
      %v1045 = vadd.f32 %v1043, %v1044
      %v1046 = vmul.f32 %v982, 0.03125
      %v1047 = vmul.f32 %v991, 0.03125
      %v1048 = vmul.f32 %v1000, 0.03125
      %v1049 = vmul.f32 %v1009, 0.03125
      %v1050 = vmul.f32 %v1018, 0.03125
      %v1051 = vmul.f32 %v1027, 0.03125
      %v1052 = vmul.f32 %v1036, 0.03125
      %v1053 = vmul.f32 %v1045, 0.03125
      %v1062 = vsel %vm504, %v928, %v910
      %v1063 = vsel %vm506, %v946, %v1062
      %v1064 = vsel %vm508, %v964, %v1063
      %v1065 = vsel %vm504, %v937, %v919
      %v1066 = vsel %vm506, %v955, %v1065
      %v1067 = vsel %vm508, %v973, %v1066
      %v1078 = vsel %vm504, %v1048, %v1046
      %v1079 = vsel %vm506, %v1050, %v1078
      %v1080 = vsel %vm508, %v1052, %v1079
      %v1081 = vsel %vm504, %v1049, %v1047
      %v1082 = vsel %vm506, %v1051, %v1081
      %v1083 = vsel %vm508, %v1053, %v1082
      %v1086 = vpack.c.bf16 %v1064, %v1064
      %v1087 = vpack.c.bf16 %v1067, %v1067
      %v1088 = vpack.c.bf16 %v1080, %v1080
      %v1089 = vpack.c.bf16 %v1083, %v1083
      %v1090 = vld [vmem:[%s5] sm:$0xff]
      %v1091 = vld [vmem:[%s5 + $0x8] sm:$0xff]
      %v1092 = vld [vmem:[%s5 + $0x10] sm:$0xff]
      %v1093 = vld [vmem:[%s5 + $0x18] sm:$0xff]
      %v1094 = vld [vmem:[%s5 + $0x20] sm:$0xff]
      %v1095 = vld [vmem:[%s5 + $0x28] sm:$0xff]
      %v1096 = vld [vmem:[%s5 + $0x30] sm:$0xff]
      %v1097 = vld [vmem:[%s5 + $0x38] sm:$0xff]
      %v1098 = vld [vmem:[%s5 + $0x40] sm:$0xff]
      %v1099 = vld [vmem:[%s5 + $0x48] sm:$0xff]
      %v1100 = vld [vmem:[%s5 + $0x50] sm:$0xff]
      %v1101 = vld [vmem:[%s5 + $0x58] sm:$0xff]
      %v1102 = vld [vmem:[%s5 + $0x60] sm:$0xff]
      %v1103 = vld [vmem:[%s5 + $0x68] sm:$0xff]
      %v1104 = vld [vmem:[%s5 + $0x70] sm:$0xff]
      %v1105 = vld [vmem:[%s5 + $0x78] sm:$0xff]
      %v1106 = vld [vmem:[%s5 + $0x80] sm:$0xff]
      %v1107 = vld [vmem:[%s5 + $0x88] sm:$0xff]
      %v1108 = vld [vmem:[%s5 + $0x90] sm:$0xff]
      %v1109 = vld [vmem:[%s5 + $0x98] sm:$0xff]
      %v1110 = vld [vmem:[%s5 + $0xa0] sm:$0xff]
      %v1111 = vld [vmem:[%s5 + $0xa8] sm:$0xff]
      %v1112 = vld [vmem:[%s5 + $0xb0] sm:$0xff]
      %v1113 = vld [vmem:[%s5 + $0xb8] sm:$0xff]
      %v1114 = vld [vmem:[%s5 + $0xc0] sm:$0xff]
      %v1115 = vld [vmem:[%s5 + $0xc8] sm:$0xff]
      %v1116 = vld [vmem:[%s5 + $0xd0] sm:$0xff]
      %v1117 = vld [vmem:[%s5 + $0xd8] sm:$0xff]
      %v1118 = vld [vmem:[%s5 + $0xe0] sm:$0xff]
      %v1119 = vld [vmem:[%s5 + $0xe8] sm:$0xff]
      %v1120 = vld [vmem:[%s5 + $0xf0] sm:$0xff]
      %v1121 = vld [vmem:[%s5 + $0xf8] sm:$0xff]
      %v1122 = vld [vmem:[%s5 + $0x100] sm:$0xff]
      %v1123 = vld [vmem:[%s5 + $0x108] sm:$0xff]
      %v1124 = vld [vmem:[%s5 + $0x110] sm:$0xff]
      %v1125 = vld [vmem:[%s5 + $0x118] sm:$0xff]
      %v1126 = vld [vmem:[%s5 + $0x120] sm:$0xff]
      %v1127 = vld [vmem:[%s5 + $0x128] sm:$0xff]
      %v1128 = vld [vmem:[%s5 + $0x130] sm:$0xff]
      %v1129 = vld [vmem:[%s5 + $0x138] sm:$0xff]
      %v1130 = vld [vmem:[%s5 + $0x140] sm:$0xff]
      %v1131 = vld [vmem:[%s5 + $0x148] sm:$0xff]
      %v1132 = vld [vmem:[%s5 + $0x150] sm:$0xff]
      %v1133 = vld [vmem:[%s5 + $0x158] sm:$0xff]
      %v1134 = vld [vmem:[%s5 + $0x160] sm:$0xff]
      %v1135 = vld [vmem:[%s5 + $0x168] sm:$0xff]
      %v1136 = vld [vmem:[%s5 + $0x170] sm:$0xff]
      %v1137 = vld [vmem:[%s5 + $0x178] sm:$0xff]
      %v1138 = vld [vmem:[%s5 + $0x180] sm:$0xff]
      %v1139 = vld [vmem:[%s5 + $0x188] sm:$0xff]
      %v1140 = vld [vmem:[%s5 + $0x190] sm:$0xff]
      %v1141 = vld [vmem:[%s5 + $0x198] sm:$0xff]
      %v1142 = vld [vmem:[%s5 + $0x1a0] sm:$0xff]
      %v1143 = vld [vmem:[%s5 + $0x1a8] sm:$0xff]
      %v1144 = vld [vmem:[%s5 + $0x1b0] sm:$0xff]
      %v1145 = vld [vmem:[%s5 + $0x1b8] sm:$0xff]
      %v1146 = vld [vmem:[%s5 + $0x1c0] sm:$0xff]
      %v1147 = vld [vmem:[%s5 + $0x1c8] sm:$0xff]
      %v1148 = vld [vmem:[%s5 + $0x1d0] sm:$0xff]
      %v1149 = vld [vmem:[%s5 + $0x1d8] sm:$0xff]
      %v1150 = vld [vmem:[%s5 + $0x1e0] sm:$0xff]
      %v1151 = vld [vmem:[%s5 + $0x1e8] sm:$0xff]
      %v1152 = vld [vmem:[%s5 + $0x1f0] sm:$0xff]
      %v1153 = vld [vmem:[%s5 + $0x1f8] sm:$0xff]
      %v1218 = vunpack.c.l.b16 %v1090
      %v1219 = vunpack.c.h.b16 %v1090
      %v1220 = vunpack.c.l.b16 %v1091
      %v1221 = vunpack.c.h.b16 %v1091
      %v1222 = vunpack.c.l.b16 %v1092
      %v1223 = vunpack.c.h.b16 %v1092
      %v1224 = vunpack.c.l.b16 %v1093
      %v1225 = vunpack.c.h.b16 %v1093
      %v1226 = vunpack.c.l.b16 %v1094
      %v1227 = vunpack.c.h.b16 %v1094
      %v1228 = vunpack.c.l.b16 %v1095
      %v1229 = vunpack.c.h.b16 %v1095
      %v1230 = vunpack.c.l.b16 %v1096
      %v1231 = vunpack.c.h.b16 %v1096
      %v1232 = vunpack.c.l.b16 %v1097
      %v1233 = vunpack.c.h.b16 %v1097
      %v1234 = vunpack.c.l.b16 %v1098
      %v1235 = vunpack.c.h.b16 %v1098
      %v1236 = vunpack.c.l.b16 %v1099
      %v1237 = vunpack.c.h.b16 %v1099
      %v1238 = vunpack.c.l.b16 %v1100
      %v1239 = vunpack.c.h.b16 %v1100
      %v1240 = vunpack.c.l.b16 %v1101
      %v1241 = vunpack.c.h.b16 %v1101
      %v1242 = vunpack.c.l.b16 %v1102
      %v1243 = vunpack.c.h.b16 %v1102
      %v1244 = vunpack.c.l.b16 %v1103
      %v1245 = vunpack.c.h.b16 %v1103
      %v1246 = vunpack.c.l.b16 %v1104
      %v1247 = vunpack.c.h.b16 %v1104
      %v1248 = vunpack.c.l.b16 %v1105
      %v1249 = vunpack.c.h.b16 %v1105
      %v1250 = vunpack.c.l.b16 %v1106
      %v1251 = vunpack.c.h.b16 %v1106
      %v1252 = vunpack.c.l.b16 %v1107
      %v1253 = vunpack.c.h.b16 %v1107
      %v1254 = vunpack.c.l.b16 %v1108
      %v1255 = vunpack.c.h.b16 %v1108
      %v1256 = vunpack.c.l.b16 %v1109
      %v1257 = vunpack.c.h.b16 %v1109
      %v1258 = vunpack.c.l.b16 %v1110
      %v1259 = vunpack.c.h.b16 %v1110
      %v1260 = vunpack.c.l.b16 %v1111
      %v1261 = vunpack.c.h.b16 %v1111
      %v1262 = vunpack.c.l.b16 %v1112
      %v1263 = vunpack.c.h.b16 %v1112
      %v1264 = vunpack.c.l.b16 %v1113
      %v1265 = vunpack.c.h.b16 %v1113
      %v1266 = vunpack.c.l.b16 %v1114
      %v1267 = vunpack.c.h.b16 %v1114
      %v1268 = vunpack.c.l.b16 %v1115
      %v1269 = vunpack.c.h.b16 %v1115
      %v1270 = vunpack.c.l.b16 %v1116
      %v1271 = vunpack.c.h.b16 %v1116
      %v1272 = vunpack.c.l.b16 %v1117
      %v1273 = vunpack.c.h.b16 %v1117
      %v1274 = vunpack.c.l.b16 %v1118
      %v1275 = vunpack.c.h.b16 %v1118
      %v1276 = vunpack.c.l.b16 %v1119
      %v1277 = vunpack.c.h.b16 %v1119
      %v1278 = vunpack.c.l.b16 %v1120
      %v1279 = vunpack.c.h.b16 %v1120
      %v1280 = vunpack.c.l.b16 %v1121
      %v1281 = vunpack.c.h.b16 %v1121
      %v1282 = vunpack.c.l.b16 %v1122
      %v1283 = vunpack.c.h.b16 %v1122
      %v1284 = vunpack.c.l.b16 %v1123
      %v1285 = vunpack.c.h.b16 %v1123
      %v1286 = vunpack.c.l.b16 %v1124
      %v1287 = vunpack.c.h.b16 %v1124
      %v1288 = vunpack.c.l.b16 %v1125
      %v1289 = vunpack.c.h.b16 %v1125
      %v1290 = vunpack.c.l.b16 %v1126
      %v1291 = vunpack.c.h.b16 %v1126
      %v1292 = vunpack.c.l.b16 %v1127
      %v1293 = vunpack.c.h.b16 %v1127
      %v1294 = vunpack.c.l.b16 %v1128
      %v1295 = vunpack.c.h.b16 %v1128
      %v1296 = vunpack.c.l.b16 %v1129
      %v1297 = vunpack.c.h.b16 %v1129
      %v1298 = vunpack.c.l.b16 %v1130
      %v1299 = vunpack.c.h.b16 %v1130
      %v1300 = vunpack.c.l.b16 %v1131
      %v1301 = vunpack.c.h.b16 %v1131
      %v1302 = vunpack.c.l.b16 %v1132
      %v1303 = vunpack.c.h.b16 %v1132
      %v1304 = vunpack.c.l.b16 %v1133
      %v1305 = vunpack.c.h.b16 %v1133
      %v1306 = vunpack.c.l.b16 %v1134
      %v1307 = vunpack.c.h.b16 %v1134
      %v1308 = vunpack.c.l.b16 %v1135
      %v1309 = vunpack.c.h.b16 %v1135
      %v1310 = vunpack.c.l.b16 %v1136
      %v1311 = vunpack.c.h.b16 %v1136
      %v1312 = vunpack.c.l.b16 %v1137
      %v1313 = vunpack.c.h.b16 %v1137
      %v1314 = vunpack.c.l.b16 %v1138
      %v1315 = vunpack.c.h.b16 %v1138
      %v1316 = vunpack.c.l.b16 %v1139
      %v1317 = vunpack.c.h.b16 %v1139
      %v1318 = vunpack.c.l.b16 %v1140
      %v1319 = vunpack.c.h.b16 %v1140
      %v1320 = vunpack.c.l.b16 %v1141
      %v1321 = vunpack.c.h.b16 %v1141
      %v1322 = vunpack.c.l.b16 %v1142
      %v1323 = vunpack.c.h.b16 %v1142
      %v1324 = vunpack.c.l.b16 %v1143
      %v1325 = vunpack.c.h.b16 %v1143
      %v1326 = vunpack.c.l.b16 %v1144
      %v1327 = vunpack.c.h.b16 %v1144
      %v1328 = vunpack.c.l.b16 %v1145
      %v1329 = vunpack.c.h.b16 %v1145
      %v1330 = vunpack.c.l.b16 %v1146
      %v1331 = vunpack.c.h.b16 %v1146
      %v1332 = vunpack.c.l.b16 %v1147
      %v1333 = vunpack.c.h.b16 %v1147
      %v1334 = vunpack.c.l.b16 %v1148
      %v1335 = vunpack.c.h.b16 %v1148
      %v1336 = vunpack.c.l.b16 %v1149
      %v1337 = vunpack.c.h.b16 %v1149
      %v1338 = vunpack.c.l.b16 %v1150
      %v1339 = vunpack.c.h.b16 %v1150
      %v1340 = vunpack.c.l.b16 %v1151
      %v1341 = vunpack.c.h.b16 %v1151
      %v1342 = vunpack.c.l.b16 %v1152
      %v1343 = vunpack.c.h.b16 %v1152
      %v1344 = vunpack.c.l.b16 %v1153
      %v1345 = vunpack.c.h.b16 %v1153
      %v1346 = vpack.c.b16 %v1220, %v1218
      %v1347 = vpack.c.b16 %v1221, %v1219
      %v1348 = vpack.c.b16 %v1224, %v1222
      %v1349 = vpack.c.b16 %v1225, %v1223
      %v1350 = vpack.c.b16 %v1228, %v1226
      %v1351 = vpack.c.b16 %v1229, %v1227
      %v1352 = vpack.c.b16 %v1232, %v1230
      %v1353 = vpack.c.b16 %v1233, %v1231
      %v1354 = vpack.c.b16 %v1236, %v1234
      %v1355 = vpack.c.b16 %v1237, %v1235
      %v1356 = vpack.c.b16 %v1240, %v1238
      %v1357 = vpack.c.b16 %v1241, %v1239
      %v1358 = vpack.c.b16 %v1244, %v1242
      %v1359 = vpack.c.b16 %v1245, %v1243
      %v1360 = vpack.c.b16 %v1248, %v1246
      %v1361 = vpack.c.b16 %v1249, %v1247
      %v1362 = vpack.c.b16 %v1252, %v1250
      %v1363 = vpack.c.b16 %v1253, %v1251
      %v1364 = vpack.c.b16 %v1256, %v1254
      %v1365 = vpack.c.b16 %v1257, %v1255
      %v1366 = vpack.c.b16 %v1260, %v1258
      %v1367 = vpack.c.b16 %v1261, %v1259
      %v1368 = vpack.c.b16 %v1264, %v1262
      %v1369 = vpack.c.b16 %v1265, %v1263
      %v1370 = vpack.c.b16 %v1268, %v1266
      %v1371 = vpack.c.b16 %v1269, %v1267
      %v1372 = vpack.c.b16 %v1272, %v1270
      %v1373 = vpack.c.b16 %v1273, %v1271
      %v1374 = vpack.c.b16 %v1276, %v1274
      %v1375 = vpack.c.b16 %v1277, %v1275
      %v1376 = vpack.c.b16 %v1280, %v1278
      %v1377 = vpack.c.b16 %v1281, %v1279
      %v1378 = vpack.c.b16 %v1284, %v1282
      %v1379 = vpack.c.b16 %v1285, %v1283
      %v1380 = vpack.c.b16 %v1288, %v1286
      %v1381 = vpack.c.b16 %v1289, %v1287
      %v1382 = vpack.c.b16 %v1292, %v1290
      %v1383 = vpack.c.b16 %v1293, %v1291
      %v1384 = vpack.c.b16 %v1296, %v1294
      %v1385 = vpack.c.b16 %v1297, %v1295
      %v1386 = vpack.c.b16 %v1300, %v1298
      %v1387 = vpack.c.b16 %v1301, %v1299
      %v1388 = vpack.c.b16 %v1304, %v1302
      %v1389 = vpack.c.b16 %v1305, %v1303
      %v1390 = vpack.c.b16 %v1308, %v1306
      %v1391 = vpack.c.b16 %v1309, %v1307
      %v1392 = vpack.c.b16 %v1312, %v1310
      %v1393 = vpack.c.b16 %v1313, %v1311
      %v1394 = vpack.c.b16 %v1316, %v1314
      %v1395 = vpack.c.b16 %v1317, %v1315
      %v1396 = vpack.c.b16 %v1320, %v1318
      %v1397 = vpack.c.b16 %v1321, %v1319
      %v1398 = vpack.c.b16 %v1324, %v1322
      %v1399 = vpack.c.b16 %v1325, %v1323
      %v1400 = vpack.c.b16 %v1328, %v1326
      %v1401 = vpack.c.b16 %v1329, %v1327
      %v1402 = vpack.c.b16 %v1332, %v1330
      %v1403 = vpack.c.b16 %v1333, %v1331
      %v1404 = vpack.c.b16 %v1336, %v1334
      %v1405 = vpack.c.b16 %v1337, %v1335
      %v1406 = vpack.c.b16 %v1340, %v1338
      %v1407 = vpack.c.b16 %v1341, %v1339
      %v1408 = vpack.c.b16 %v1344, %v1342
      %v1409 = vpack.c.b16 %v1345, %v1343
      %1474 = vmatprep.subr.bf16.mxu0 %v1347
      %1475 = vmatpush1.bf16.msra.mxu0 %v1346
      %1476 = vmatprep.subr.bf16.mxu0 %v1349
      %1477 = vmatpush1.bf16.msra.mxu0 %v1348
      %1478 = vmatprep.subr.bf16.mxu0 %v1351
      %1479 = vmatpush1.bf16.msra.mxu0 %v1350
      %1480 = vmatprep.subr.bf16.mxu0 %v1353
      %1481 = vmatpush1.bf16.msra.mxu0 %v1352
      %1482 = vmatprep.subr.bf16.mxu0 %v1355
      %1483 = vmatpush1.bf16.msra.mxu0 %v1354
      %1484 = vmatprep.subr.bf16.mxu0 %v1357
      %1485 = vmatpush1.bf16.msra.mxu0 %v1356
      %1486 = vmatprep.subr.bf16.mxu0 %v1359
      %1487 = vmatpush1.bf16.msra.mxu0 %v1358
      %1488 = vmatprep.subr.bf16.mxu0 %v1361
      %1489 = vmatpush1.bf16.msra.mxu0 %v1360
      %1490 = vmatprep.subr.bf16.mxu0 %v1363
      %1491 = vmatpush1.bf16.msra.mxu0 %v1362
      %1492 = vmatprep.subr.bf16.mxu0 %v1365
      %1493 = vmatpush1.bf16.msra.mxu0 %v1364
      %1494 = vmatprep.subr.bf16.mxu0 %v1367
      %1495 = vmatpush1.bf16.msra.mxu0 %v1366
      %1496 = vmatprep.subr.bf16.mxu0 %v1369
      %1497 = vmatpush1.bf16.msra.mxu0 %v1368
      %1498 = vmatprep.subr.bf16.mxu0 %v1371
      %1499 = vmatpush1.bf16.msra.mxu0 %v1370
      %1500 = vmatprep.subr.bf16.mxu0 %v1373
      %1501 = vmatpush1.bf16.msra.mxu0 %v1372
      %1502 = vmatprep.subr.bf16.mxu0 %v1375
      %1503 = vmatpush1.bf16.msra.mxu0 %v1374
      %1504 = vmatprep.subr.bf16.mxu0 %v1377
      %1505 = vmatpush1.bf16.msra.mxu0 %v1376
      %1506 = vmatprep.mubr.bf16.mxu0 %v1087
      %1507 = vmatmul.mubr.bf16.gmra.mrb[0].mxu0 %v1086
      %v1508 = vpop.f32.mrb[0].mxu0
      %v1509 = vadd.f32 0.0, %v1508
      %v1510 = vpop.f32.mrb[0].mxu0
      %v1511 = vadd.f32 0.0, %v1510
      %v1512 = vpop.f32.mrb[0].mxu0
      %v1513 = vpop.f32.mrb[0].mxu0
      %1514 = vdwg.mxu0
      %1515 = vmatprep.subr.bf16.mxu0 %v1379
      %1516 = vmatpush1.bf16.msra.mxu0 %v1378
      %1517 = vmatprep.subr.bf16.mxu0 %v1381
      %1518 = vmatpush1.bf16.msra.mxu0 %v1380
      %1519 = vmatprep.subr.bf16.mxu0 %v1383
      %1520 = vmatpush1.bf16.msra.mxu0 %v1382
      %1521 = vmatprep.subr.bf16.mxu0 %v1385
      %1522 = vmatpush1.bf16.msra.mxu0 %v1384
      %1523 = vmatprep.subr.bf16.mxu0 %v1387
      %1524 = vmatpush1.bf16.msra.mxu0 %v1386
      %1525 = vmatprep.subr.bf16.mxu0 %v1389
      %1526 = vmatpush1.bf16.msra.mxu0 %v1388
      %1527 = vmatprep.subr.bf16.mxu0 %v1391
      %1528 = vmatpush1.bf16.msra.mxu0 %v1390
      %1529 = vmatprep.subr.bf16.mxu0 %v1393
      %1530 = vmatpush1.bf16.msra.mxu0 %v1392
      %1531 = vmatprep.subr.bf16.mxu0 %v1395
      %1532 = vmatpush1.bf16.msra.mxu0 %v1394
      %1533 = vmatprep.subr.bf16.mxu0 %v1397
      %1534 = vmatpush1.bf16.msra.mxu0 %v1396
      %1535 = vmatprep.subr.bf16.mxu0 %v1399
      %1536 = vmatpush1.bf16.msra.mxu0 %v1398
      %1537 = vmatprep.subr.bf16.mxu0 %v1401
      %1538 = vmatpush1.bf16.msra.mxu0 %v1400
      %1539 = vmatprep.subr.bf16.mxu0 %v1403
      %1540 = vmatpush1.bf16.msra.mxu0 %v1402
      %1541 = vmatprep.subr.bf16.mxu0 %v1405
      %1542 = vmatpush1.bf16.msra.mxu0 %v1404
      %1543 = vmatprep.subr.bf16.mxu0 %v1407
      %1544 = vmatpush1.bf16.msra.mxu0 %v1406
      %1545 = vmatprep.subr.bf16.mxu0 %v1409
      %1546 = vmatpush1.bf16.msra.mxu0 %v1408
      %1547 = vmatprep.mubr.bf16.mxu0 %v1089
      %1548 = vmatmul.mubr.bf16.gmra.mrb[0].mxu0 %v1088
      %v1549 = vpop.f32.mrb[0].mxu0
      %v1550 = vadd.f32 %v1509, %v1549
      %v1551 = vpop.f32.mrb[0].mxu0
      %v1552 = vadd.f32 %v1511, %v1551
      %v1553 = vpop.f32.mrb[0].mxu0
      %v1554 = vpop.f32.mrb[0].mxu0
      %1555 = vdwg.mxu0
      %v1556 = vxor.u32 %v1550, 2147483648
      %v1557 = vxor.u32 %v1552, 2147483648
      %v1558 = vmul.f32 %v1556, 1.442695
      %v1559 = vpow.pop %v1558
      %v1560 = vmul.f32 %v1557, 1.442695
      %v1561 = vpow.pop %v1560
      %v1562 = vadd.f32 %v1559, 1.0
      %v1563 = vadd.f32 %v1561, 1.0
      %v1564 = vrcp.pop %v1562
      %v1565 = vmul.f32 1.0, %v1564
      %v1566 = vrcp.pop %v1563
      %v1567 = vmul.f32 1.0, %v1566
      %v1570 = vcombine.low %v1565, %v1567
      %v1572 = vunpack.c.l.s4 1966171168
      %v1573 = vunpack.c.0.s8 %v1572
      %v1574 = vlaneseq
      %v1575 = vshrl.u32 %v1574, 7
      %v1576 = vsub.s32 %v1573, %v1575
      %v1577 = vrot.slane %v1570, %v1576
      %v1578 = vcombine.high %v1577, %v1577
      %v1580 = vunpack.c.l.s4 1966171168
      %v1581 = vunpack.c.0.s8 %v1580
      %v1582 = vlaneseq
      %v1583 = vshrl.u32 %v1582, 7
      %v1584 = vsub.s32 %v1581, %v1583
      %v1585 = vrot.slane %v1577, %v1584
      %v1587 = vunpack.c.l.s4 1966171168
      %v1588 = vunpack.c.0.s8 %v1587
      %v1589 = vlaneseq
      %v1590 = vshrl.u32 %v1589, 7
      %v1591 = vsub.s32 %v1588, %v1590
      %v1592 = vrot.slane %v1578, %v1591
      %v1593 = vcombine.high %v1585, %v1585
      %v1594 = vcombine.high %v1592, %v1592
      %v1595 = vlaneseq
      %v1596 = vshrl.u32 %v1595, 7
      %v1597 = vsub.s32 0, %v1596
      %v1598 = vrot.slane %v1585, %v1597
      %v1599 = vlaneseq
      %v1600 = vshrl.u32 %v1599, 7
      %v1601 = vsub.s32 1, %v1600
      %v1602 = vrot.slane %v1585, %v1601
      %v1603 = vlaneseq
      %v1604 = vshrl.u32 %v1603, 7
      %v1605 = vsub.s32 0, %v1604
      %v1606 = vrot.slane %v1592, %v1605
      %v1607 = vlaneseq
      %v1608 = vshrl.u32 %v1607, 7
      %v1609 = vsub.s32 1, %v1608
      %v1610 = vrot.slane %v1592, %v1609
      %v1611 = vlaneseq
      %v1612 = vshrl.u32 %v1611, 7
      %v1613 = vsub.s32 0, %v1612
      %v1614 = vrot.slane %v1593, %v1613
      %v1615 = vlaneseq
      %v1616 = vshrl.u32 %v1615, 7
      %v1617 = vsub.s32 1, %v1616
      %v1618 = vrot.slane %v1593, %v1617
      %v1619 = vlaneseq
      %v1620 = vshrl.u32 %v1619, 7
      %v1621 = vsub.s32 0, %v1620
      %v1622 = vrot.slane %v1594, %v1621
      %v1623 = vlaneseq
      %v1624 = vshrl.u32 %v1623, 7
      %v1625 = vsub.s32 1, %v1624
      %v1626 = vrot.slane %v1594, %v1625
      %v1635 = vmul.f32 %v870, %v1598
      %v1636 = vmul.f32 %v871, %v1602
      %v1637 = vmul.f32 %v872, %v1598
      %v1638 = vmul.f32 %v873, %v1602
      %v1639 = vmul.f32 %v874, %v1598
      %v1640 = vmul.f32 %v875, %v1602
      %v1641 = vmul.f32 %v876, %v1598
      %v1642 = vmul.f32 %v877, %v1602
      %v1643 = vmul.f32 %v878, %v1606
      %v1644 = vmul.f32 %v879, %v1610
      %v1645 = vmul.f32 %v880, %v1606
      %v1646 = vmul.f32 %v881, %v1610
      %v1647 = vmul.f32 %v882, %v1606
      %v1648 = vmul.f32 %v883, %v1610
      %v1649 = vmul.f32 %v884, %v1606
      %v1650 = vmul.f32 %v885, %v1610
      %v1651 = vmul.f32 %v886, %v1614
      %v1652 = vmul.f32 %v887, %v1618
      %v1653 = vmul.f32 %v888, %v1614
      %v1654 = vmul.f32 %v889, %v1618
      %v1655 = vmul.f32 %v890, %v1614
      %v1656 = vmul.f32 %v891, %v1618
      %v1657 = vmul.f32 %v892, %v1614
      %v1658 = vmul.f32 %v893, %v1618
      %v1659 = vmul.f32 %v894, %v1622
      %v1660 = vmul.f32 %v895, %v1626
      %v1661 = vmul.f32 %v896, %v1622
      %v1662 = vmul.f32 %v897, %v1626
      %v1663 = vmul.f32 %v898, %v1622
      %v1664 = vmul.f32 %v899, %v1626
      %v1665 = vmul.f32 %v900, %v1622
      %v1666 = vmul.f32 %v901, %v1626
      %1667 = vst [vmem:[%s258] sm:$0xff] %v1635
      %1668 = vst [vmem:[%s258 + $0x8] sm:$0xff] %v1636
      %1669 = vst [vmem:[%s258 + $0x10] sm:$0xff] %v1637
      %1670 = vst [vmem:[%s258 + $0x18] sm:$0xff] %v1638
      %1671 = vst [vmem:[%s258 + $0x20] sm:$0xff] %v1639
      %1672 = vst [vmem:[%s258 + $0x28] sm:$0xff] %v1640
      %1673 = vst [vmem:[%s258 + $0x30] sm:$0xff] %v1641
      %1674 = vst [vmem:[%s258 + $0x38] sm:$0xff] %v1642
      %1675 = vst [vmem:[%s258 + $0x40] sm:$0xff] %v1643
      %1676 = vst [vmem:[%s258 + $0x48] sm:$0xff] %v1644
      %1677 = vst [vmem:[%s258 + $0x50] sm:$0xff] %v1645
      %1678 = vst [vmem:[%s258 + $0x58] sm:$0xff] %v1646
      %1679 = vst [vmem:[%s258 + $0x60] sm:$0xff] %v1647
      %1680 = vst [vmem:[%s258 + $0x68] sm:$0xff] %v1648
      %1681 = vst [vmem:[%s258 + $0x70] sm:$0xff] %v1649
      %1682 = vst [vmem:[%s258 + $0x78] sm:$0xff] %v1650
      %1683 = vst [vmem:[%s258 + $0x80] sm:$0xff] %v1651
      %1684 = vst [vmem:[%s258 + $0x88] sm:$0xff] %v1652
      %1685 = vst [vmem:[%s258 + $0x90] sm:$0xff] %v1653
      %1686 = vst [vmem:[%s258 + $0x98] sm:$0xff] %v1654
      %1687 = vst [vmem:[%s258 + $0xa0] sm:$0xff] %v1655
      %1688 = vst [vmem:[%s258 + $0xa8] sm:$0xff] %v1656
      %1689 = vst [vmem:[%s258 + $0xb0] sm:$0xff] %v1657
      %1690 = vst [vmem:[%s258 + $0xb8] sm:$0xff] %v1658
      %1691 = vst [vmem:[%s258 + $0xc0] sm:$0xff] %v1659
      %1692 = vst [vmem:[%s258 + $0xc8] sm:$0xff] %v1660
      %1693 = vst [vmem:[%s258 + $0xd0] sm:$0xff] %v1661
      %1694 = vst [vmem:[%s258 + $0xd8] sm:$0xff] %v1662
      %1695 = vst [vmem:[%s258 + $0xe0] sm:$0xff] %v1663
      %1696 = vst [vmem:[%s258 + $0xe8] sm:$0xff] %v1664
      %1697 = vst [vmem:[%s258 + $0xf0] sm:$0xff] %v1665
      %1698 = vst [vmem:[%s258 + $0xf8] sm:$0xff] %v1666
      %s1699 = smul.u32 4, %s17
      %p1700 = scmp.lt.s32.totalorder %s1699, 7
      %s1701 = scalar_select %p1700, %s1699, 7
      %s1702 = smul.addr %s1701, 8
      %s1703 = smul.addr %s1702, 8
      %s1704 = scalar_lea.vmem %s6, %s1703
      // Predicated region
      $region45: #{cbam_pallas.1} parent=43 // pred_check
        %p1705 = pneg %p166
      $region46: #{cbam_pallas.1} parent=43 // pred_check_branch
        %1707 = sbr.rel (%p1705) target = $region48
      $region47: #{cbam_pallas.1} parent=43 // pred_region
        %s1708 = smul.u32 4, %s17
      $region48: #{cbam_pallas.1} parent=43 // pred_fallthru
        _
    $region44: #{cbam_pallas.1} parent=5 // pred_fallthru
      _
    %p1709 = scmp.le.s32.totalorder 2, %s12
    // Predicated region
    $region49: #{cbam_pallas.1} parent=5 // pred_check
      %p1710 = pneg %p1709
    $region50: #{cbam_pallas.1} parent=5 // pred_check_branch
      %1712 = sbr.rel (%p1710) target = $region52
    $region51: #{cbam_pallas.1} parent=5 // pred_region
      %s1713 = ssub.s32 %s12, 2
      // Predicated region
      $region53: #{cbam_pallas.1} parent=51 // pred_check
        %p1714 = pneg %p172
      $region54: #{cbam_pallas.1} parent=51 // pred_check_branch
        %1716 = sbr.rel (%p1714) target = $region56
      $region55: #{cbam_pallas.1} parent=51 // pred_region
        %s1717 = smul.u32 4, %s18
        %p1718 = scmp.lt.s32.totalorder %s1717, 7
        %s1719 = scalar_select %p1718, %s1717, 7
        %s1720 = smul.addr %s1719, 8
        %s1721 = smul.addr %s1720, 8
        %s1722 = scalar_lea.vmem %s6, %s1721
      $region56: #{cbam_pallas.1} parent=51 // pred_fallthru
        _
    $region52: #{cbam_pallas.1} parent=5 // pred_fallthru
      _
  $region6: #{cbam_pallas.1} parent=0 // loop_footer
    %s16 = sadd.s32 1, %s12
  $region7: #{cbam_pallas.1} parent=0 // loop_footer_branch
    %11 = sbr.rel target = $region3
  $region8: #{cbam_pallas.1} parent=0 // loop_exit
    _

</llo_original>
